<compile_context>
chip_gen: v7x
topology: tpu7x:2x2x1
jax: 0.10.0
libtpu: 0.0.40
codegen_flags: <defaults>
</compile_context>

<pallas_src>
import functools

import jax
import jax.numpy as jnp
from jax.experimental import pallas as pl
from jax.experimental.pallas import tpu as pltpu


def _attention_pooling_kernel(x_ref, w1_ref, b1_ref, w2r_ref, b2_ref, o_ref, *,
                              valid_t):
    # x_ref:   (Bb, T, D)  bf16 block of batch rows (T possibly padded)
    # w1_ref:  (D, H)      bf16 first linear weight (pre-transposed: x @ W1)
    # b1_ref:  (1, H)      f32
    # w2r_ref: (1, H)      f32 second linear weight stored as a row
    # b2_ref:  (1, 1)      f32 scalar bias in SMEM
    # o_ref:   (Bb, D)
    Bb, T, D = x_ref.shape
    H = w1_ref.shape[1]

    # --- first linear + tanh: one large MXU matmul, bf16 operands, f32 acc ---
    # (Bb, T, D) -> (Bb*T, D) is layout-free: wrapper pads T to the bf16
    # sublane packing (16).
    h = jnp.dot(x_ref[...].reshape(Bb * T, D), w1_ref[...],
                preferred_element_type=jnp.float32)
    h = jnp.tanh(h + b1_ref[...])                         # (Bb*T, H) f32
    h3 = h.reshape(Bb, T, H)

    # --- score projection (N=1): VPU multiply + lane reduce, keep MXU free ---
    s = jnp.sum(h3 * w2r_ref[...].reshape(1, 1, H), axis=-1) + b2_ref[0, 0]  # (Bb, T)

    if valid_t != T:  # static python condition: mask padded sequence positions
        t_idx = jax.lax.broadcasted_iota(jnp.int32, (Bb, T), 1)
        s = jnp.where(t_idx < valid_t, s, -jnp.inf)

    # --- softmax numerator over T (normalization deferred until after pooling) ---
    m = jnp.max(s, axis=-1, keepdims=True)                # (Bb, 1)
    e = jnp.exp(s - m)                                    # (Bb, T)
    denom = jnp.sum(e, axis=-1, keepdims=True)            # (Bb, 1)

    # --- weighted pooling over T: VPU broadcast-multiply + sublane reduce ---
    # Re-read x_ref here (instead of reusing a value captured before the
    # matmul) to bound the f32 live range of the block.
    pooled = jnp.sum(e[:, :, None] * x_ref[...].astype(jnp.float32), axis=1)  # (Bb, D)

    # Exact normalization: only Bb reciprocals, effectively free.
    inv = 1.0 / denom
    o_ref[...] = (pooled * inv).astype(o_ref.dtype)


def _default_vmem_limit():
    """Generation-aware VMEM budget: ~65% of physical, capped at 100 MiB."""
    try:
        phys = pltpu.get_tpu_info().vmem_capacity_bytes
    except Exception:
        phys = 64 * 1024 * 1024  # conservative fallback (v7x per-TC size)
    return min(int(phys * 0.65), 100 * 1024 * 1024)


def _choose_batch_block(B, T, D, H, x_itemsize, vmem_limit_bytes):
    """Pick how many batch rows to fuse per grid step.

    Guarantees: multiple of 8 or exactly B; budgeted against VMEM; prefers an
    MXU-friendly M = b_blk*T, divisors of B, and >= 4 (else 2) pipelined grid
    steps when the whole batch would otherwise fit in a single step.
    """
    # Weights are revisited every step (ideally single-buffered); be
    # conservative and budget for two buffers.
    weight_bytes = 2 * (D * H * x_itemsize + 2 * H * 4)
    budget = max(1, vmem_limit_bytes - weight_bytes - 2 * 1024 * 1024)
    per_row = (2 * T * D * x_itemsize        # double-buffered x tile
               + 2 * D * 4                   # double-buffered f32 out tile
               + T * H * 4 + T * D * 4       # f32 h / upcast temporaries
               + 64)
    cap = max(1, budget // per_row)

    if B <= 8:
        return B                              # full-dim block is always legal

    if cap >= B:
        b_blk = B
        # Prefer >= 4 (then 2) pipelined steps when each step still feeds the
        # MXU with >= ~128 rows and stays sublane-aligned (v7x: 2 TCs x >= 2
        # steps; also overlaps tanh/EUP of block i with matmul/DMA of i+1).
        for steps in (4, 2):
            cand = B // steps
            if B % steps == 0 and cand % 8 == 0 and cand * T >= 128:
                b_blk = cand
                break
        return b_blk

    # VMEM-limited: sublane-align and round to an MXU-friendly M granule.
    b_blk = max(8, (min(cap, B) // 8) * 8)
    granule = max(8, ((-(-256 // T) + 7) // 8) * 8)   # rows giving M ~= 256
    if b_blk >= granule:
        b_blk = (b_blk // granule) * granule
    # Prefer a divisor of B so the last block carries no padded rows.
    if B % b_blk != 0:
        for cand in range(b_blk, 7, -8):
            if B % cand == 0:
                b_blk = cand
                break
    return min(b_blk, B)


def attention_pooling(features, w1, b1, w2, b2, *, b_blk=None,
                      vmem_limit_bytes=None):
    """features: (B, T, D); w1: (D, H); b1: (H,); w2: (H, 1); b2: (1,)."""
    B, T, D = features.shape
    H = w1.shape[1]
    out_dtype = features.dtype

    # bf16 MXU operands (f32 accumulation in-kernel). In production the
    # features / W1 would already be stored bf16 in HBM.
    x = features.astype(jnp.bfloat16)
    w1_c = w1.astype(jnp.bfloat16)
    x_itemsize = 2

    # Guard the (Bb,T,D)->(Bb*T,D) reshape: pad T to the bf16 sublane packing.
    pack = 16
    t_pad = ((T + pack - 1) // pack) * pack
    if t_pad != T:
        x = jnp.pad(x, ((0, 0), (0, t_pad - T), (0, 0)))

    if vmem_limit_bytes is None:
        vmem_limit_bytes = _default_vmem_limit()
    if b_blk is None:
        b_blk = _choose_batch_block(B, t_pad, D, H, x_itemsize, vmem_limit_bytes)
    b_blk = max(1, min(b_blk, B))
    grid = (pl.cdiv(B, b_blk),)

    b1_2d = b1.reshape(1, H).astype(jnp.float32)
    w2_row = w2.reshape(1, H).astype(jnp.float32)       # (H, 1) -> (1, H) row
    b2_2d = b2.reshape(1, 1).astype(jnp.float32)        # scalar for SMEM

    kernel = functools.partial(_attention_pooling_kernel, valid_t=T)

    def build(weight_mode):
        def wspec(shape):
            idx = lambda b: (0,) * len(shape)
            if weight_mode is None:
                return pl.BlockSpec(shape, idx)
            return pl.BlockSpec(shape, idx, pipeline_mode=weight_mode)

        return pl.pallas_call(
            kernel,
            out_shape=jax.ShapeDtypeStruct((B, D), out_dtype),
            grid_spec=pltpu.PrefetchScalarGridSpec(
                num_scalar_prefetch=0,
                grid=grid,
                in_specs=[
                    pl.BlockSpec((b_blk, t_pad, D), lambda b: (b, 0, 0)),   # x
                    wspec((D, H)),                                          # W1
                    wspec((1, H)),                                          # b1
                    wspec((1, H)),                                          # W2 row
                    pl.BlockSpec(memory_space=pltpu.MemorySpace.SMEM),      # b2
                ],
                out_specs=pl.BlockSpec((b_blk, D), lambda b: (b, 0)),
            ),
            compiler_params=pltpu.CompilerParams(
                dimension_semantics=("parallel",),
                vmem_limit_bytes=vmem_limit_bytes,
            ),
        )

    args = (x, w1_c, b1_2d, w2_row, b2_2d)
    try:
        # Single-buffer the constant-index weight operands: they are revisited
        # every grid step, so a second buffer is pure VMEM waste.
        out = build(pl.Buffered(1))(*args)
        return jax.block_until_ready(out)
    except Exception:
        # TODO(synk): fallback for jax versions without single-buffered
        # pipeline_mode support on grid BlockSpecs.
        return build(None)(*args)


def attention_pooling_ref(features, w1, b1, w2, b2):
    """Pure-JAX reference matching the PyTorch forward."""
    s = jnp.tanh(features @ w1 + b1) @ w2 + b2            # (B, T, 1)
    p = jax.nn.softmax(s, axis=1)                         # softmax over T
    return jnp.sum(features * p, axis=1)                  # (B, D)


if __name__ == "__main__":
    key = jax.random.PRNGKey(0)
    # Small but TPU-friendly shapes: D multiple of 128 (lane-dense output),
    # T multiple of the bf16 packing, B large enough for 2 pipelined steps.
    B, T, D = 16, 16, 256
    H = D // 2

    k_x, k_w1, k_b1, k_w2, k_b2 = jax.random.split(key, 5)

    features = jax.random.normal(k_x, (B, T, D), dtype=jnp.float32)
    # nn.Linear(D, D//2) / nn.Linear(D//2, 1) parameters, stored pre-transposed
    # so the kernel computes x @ W.
    w1 = jax.random.normal(k_w1, (D, H), dtype=jnp.float32) * (1.0 / jnp.sqrt(D))
    b1 = jax.random.normal(k_b1, (H,), dtype=jnp.float32) * 0.1
    w2 = jax.random.normal(k_w2, (H, 1), dtype=jnp.float32) * (1.0 / jnp.sqrt(H))
    b2 = jax.random.normal(k_b2, (1,), dtype=jnp.float32) * 0.1

    out = attention_pooling(features, w1, b1, w2, b2)
    out = jax.block_until_ready(out)
    assert out.shape == (B, D)

    # Tight check against a reference whose inputs are rounded to the same
    # bf16 operands the MXU consumes (isolates accumulation-order noise only).
    f_m = features.astype(jnp.bfloat16).astype(jnp.float32)
    w1_m = w1.astype(jnp.bfloat16).astype(jnp.float32)
    ref_matched = attention_pooling_ref(f_m, w1_m, b1, w2, b2)
    assert jnp.allclose(out, ref_matched, atol=5e-3, rtol=5e-3), \
        "mismatch vs bf16-matched reference"

    # Looser check against the pure-f32 reference: the gap is only the bf16
    # rounding of the MXU operands (softmax normalization is exact now).
    ref = attention_pooling_ref(features, w1, b1, w2, b2)
    assert jnp.allclose(out, ref, atol=3e-2, rtol=3e-2), "mismatch vs reference"

    print("KERNEL_OK")
</pallas_src>

<mosaic_0001>
module attributes {stable_mosaic.version = 11 : i64} {
  func.func @_attention_pooling_kernel(%arg0: i32, %arg1: memref<8x16x256xbf16, #tpu.memory_space<vmem>>, %arg2: memref<256x128xbf16, #tpu.memory_space<vmem>>, %arg3: memref<1x128xf32, #tpu.memory_space<vmem>>, %arg4: memref<1x128xf32, #tpu.memory_space<vmem>>, %arg5: memref<1x1xf32, #tpu.memory_space<smem>>, %arg6: memref<8x256xf32, #tpu.memory_space<vmem>>) attributes {dimension_semantics = [#tpu.dimension_semantics<parallel>], iteration_bounds = array<i64: 2>, scalar_prefetch = 0 : i64, scratch_operands = 0 : i64, tpu.core_type = #tpu.core_type<tc>, window_params = [{transform_indices = @transform_0, window_bounds = array<i64: 8, 16, 256>}, {pipeline_mode = #tpu.pipeline_mode<synchronous>, transform_indices = @transform_1, window_bounds = array<i64: 256, 128>}, {pipeline_mode = #tpu.pipeline_mode<synchronous>, transform_indices = @transform_2, window_bounds = array<i64: 1, 128>}, {pipeline_mode = #tpu.pipeline_mode<synchronous>, transform_indices = @transform_3, window_bounds = array<i64: 1, 128>}, {transform_indices = @transform_4, window_bounds = array<i64: 1, 1>}, {transform_indices = @transform_5, window_bounds = array<i64: 8, 256>}]} {
    %c0 = arith.constant 0 : index
    %c0_0 = arith.constant 0 : index
    %c0_1 = arith.constant 0 : index
    %0 = vector.load %arg1[%c0, %c0_0, %c0_1] : memref<8x16x256xbf16, #tpu.memory_space<vmem>>, vector<8x16x256xbf16>
    %1 = vector.shape_cast %0 : vector<8x16x256xbf16> to vector<128x256xbf16>
    %c0_2 = arith.constant 0 : index
    %c0_3 = arith.constant 0 : index
    %2 = vector.load %arg2[%c0_2, %c0_3] : memref<256x128xbf16, #tpu.memory_space<vmem>>, vector<256x128xbf16>
    %cst = arith.constant dense<0.000000e+00> : vector<128x128xf32>
    %3 = tpu.matmul %1, %2, %cst {dimension_numbers = #tpu.dot_dimension_numbers<[1], [0], [0], [1], [0, 0, 1, 1], [], []>} : vector<128x256xbf16>, vector<256x128xbf16>, vector<128x128xf32> -> vector<128x128xf32>
    %c0_4 = arith.constant 0 : index
    %c0_5 = arith.constant 0 : index
    %4 = vector.load %arg3[%c0_4, %c0_5] : memref<1x128xf32, #tpu.memory_space<vmem>>, vector<1x128xf32>
    %5 = vector.broadcast %4 : vector<1x128xf32> to vector<128x128xf32>
    %6 = arith.addf %3, %5 : vector<128x128xf32>
    %7 = math.tanh %6 : vector<128x128xf32>
    %8 = vector.shape_cast %7 : vector<128x128xf32> to vector<8x16x128xf32>
    %c0_6 = arith.constant 0 : index
    %c0_7 = arith.constant 0 : index
    %9 = vector.load %arg4[%c0_6, %c0_7] : memref<1x128xf32, #tpu.memory_space<vmem>>, vector<1x128xf32>
    %10 = vector.shape_cast %9 : vector<1x128xf32> to vector<1x1x128xf32>
    %11 = vector.broadcast %10 : vector<1x1x128xf32> to vector<8x16x128xf32>
    %12 = arith.mulf %8, %11 : vector<8x16x128xf32>
    %cst_8 = arith.constant dense<0.000000e+00> : vector<8x16xf32>
    %13 = vector.multi_reduction <add>, %12, %cst_8 [2] : vector<8x16x128xf32> to vector<8x16xf32>
    %c0_9 = arith.constant 0 : index
    %c0_10 = arith.constant 0 : index
    %14 = memref.load %arg5[%c0_9, %c0_10] : memref<1x1xf32, #tpu.memory_space<smem>>
    %15 = vector.broadcast %14 : f32 to vector<8x16xf32>
    %16 = arith.addf %13, %15 : vector<8x16xf32>
    %cst_11 = arith.constant dense<0xFF800000> : vector<8xf32>
    %17 = vector.multi_reduction <maximumf>, %16, %cst_11 [1] : vector<8x16xf32> to vector<8xf32>
    %18 = vector.shape_cast %17 : vector<8xf32> to vector<8x1xf32>
    %19 = vector.broadcast %18 : vector<8x1xf32> to vector<8x16xf32>
    %20 = arith.subf %16, %19 : vector<8x16xf32>
    %21 = math.exp %20 : vector<8x16xf32>
    %cst_12 = arith.constant dense<0.000000e+00> : vector<8xf32>
    %22 = vector.multi_reduction <add>, %21, %cst_12 [1] : vector<8x16xf32> to vector<8xf32>
    %23 = vector.shape_cast %22 : vector<8xf32> to vector<8x1xf32>
    %24 = vector.shape_cast %21 : vector<8x16xf32> to vector<8x16x1xf32>
    %c0_13 = arith.constant 0 : index
    %c0_14 = arith.constant 0 : index
    %c0_15 = arith.constant 0 : index
    %25 = vector.load %arg1[%c0_13, %c0_14, %c0_15] : memref<8x16x256xbf16, #tpu.memory_space<vmem>>, vector<8x16x256xbf16>
    %26 = arith.extf %25 : vector<8x16x256xbf16> to vector<8x16x256xf32>
    %27 = vector.broadcast %24 : vector<8x16x1xf32> to vector<8x16x256xf32>
    %28 = arith.mulf %27, %26 : vector<8x16x256xf32>
    %cst_16 = arith.constant dense<0.000000e+00> : vector<8x256xf32>
    %29 = vector.multi_reduction <add>, %28, %cst_16 [1] : vector<8x16x256xf32> to vector<8x256xf32>
    %cst_17 = arith.constant 1.000000e+00 : f32
    %30 = vector.broadcast %cst_17 : f32 to vector<8x1xf32>
    %31 = arith.divf %30, %23 : vector<8x1xf32>
    %32 = vector.broadcast %31 : vector<8x1xf32> to vector<8x256xf32>
    %33 = arith.mulf %29, %32 : vector<8x256xf32>
    %c0_18 = arith.constant 0 : index
    %c0_19 = arith.constant 0 : index
    %34 = vector.load %arg6[%c0_18, %c0_19] : memref<8x256xf32, #tpu.memory_space<vmem>>, vector<8x256xf32>
    tpu.vector_store %arg6[%c0_18, %c0_19], %33 {strides = array<i32>} : memref<8x256xf32, #tpu.memory_space<vmem>>, vector<8x256xf32>,
    return
  }
  func.func @transform_0(%arg0: i32) -> (i32, i32, i32) {
    %c0_i32 = arith.constant 0 : i32
    %c0_i32_0 = arith.constant 0 : i32
    %c0_i32_1 = arith.constant 0 : i32
    return %arg0, %c0_i32, %c0_i32_0 : i32, i32, i32
  }
  func.func @transform_1(%arg0: i32) -> (i32, i32) {
    %c0_i32 = arith.constant 0 : i32
    %c0_i32_0 = arith.constant 0 : i32
    %c0_i32_1 = arith.constant 0 : i32
    return %c0_i32, %c0_i32_0 : i32, i32
  }
  func.func @transform_2(%arg0: i32) -> (i32, i32) {
    %c0_i32 = arith.constant 0 : i32
    %c0_i32_0 = arith.constant 0 : i32
    %c0_i32_1 = arith.constant 0 : i32
    return %c0_i32, %c0_i32_0 : i32, i32
  }
  func.func @transform_3(%arg0: i32) -> (i32, i32) {
    %c0_i32 = arith.constant 0 : i32
    %c0_i32_0 = arith.constant 0 : i32
    %c0_i32_1 = arith.constant 0 : i32
    return %c0_i32, %c0_i32_0 : i32, i32
  }
  func.func @transform_4(%arg0: i32) -> (i32, i32) {
    %c0_i32 = arith.constant 0 : i32
    %c0_i32_0 = arith.constant 0 : i32
    %c0_i32_1 = arith.constant 0 : i32
    return %c0_i32, %c0_i32_0 : i32, i32
  }
  func.func @transform_5(%arg0: i32) -> (i32, i32) {
    %c0_i32 = arith.constant 0 : i32
    %c0_i32_0 = arith.constant 0 : i32
    return %arg0, %c0_i32 : i32, i32
  }
}

module attributes {stable_mosaic.version = 11 : i64} {
  func.func @_attention_pooling_kernel(%arg0: i32, %arg1: memref<8x16x256xbf16, #tpu.memory_space<vmem>>, %arg2: memref<256x128xbf16, #tpu.memory_space<vmem>>, %arg3: memref<1x128xf32, #tpu.memory_space<vmem>>, %arg4: memref<1x128xf32, #tpu.memory_space<vmem>>, %arg5: memref<1x1xf32, #tpu.memory_space<smem>>, %arg6: memref<8x256xf32, #tpu.memory_space<vmem>>) attributes {dimension_semantics = [#tpu.dimension_semantics<parallel>], iteration_bounds = array<i64: 2>, scalar_prefetch = 0 : i64, scratch_operands = 0 : i64, tpu.core_type = #tpu.core_type<tc>, window_params = [{transform_indices = @transform_0, window_bounds = array<i64: 8, 16, 256>}, {pipeline_mode = #tpu.pipeline_mode<synchronous>, transform_indices = @transform_1, window_bounds = array<i64: 256, 128>}, {pipeline_mode = #tpu.pipeline_mode<synchronous>, transform_indices = @transform_2, window_bounds = array<i64: 1, 128>}, {pipeline_mode = #tpu.pipeline_mode<synchronous>, transform_indices = @transform_3, window_bounds = array<i64: 1, 128>}, {transform_indices = @transform_4, window_bounds = array<i64: 1, 1>}, {transform_indices = @transform_5, window_bounds = array<i64: 8, 256>}]} {
    %c0 = arith.constant 0 : index
    %c0_0 = arith.constant 0 : index
    %c0_1 = arith.constant 0 : index
    %0 = vector.load %arg1[%c0, %c0_0, %c0_1] : memref<8x16x256xbf16, #tpu.memory_space<vmem>>, vector<8x16x256xbf16>
    %1 = vector.shape_cast %0 : vector<8x16x256xbf16> to vector<128x256xbf16>
    %c0_2 = arith.constant 0 : index
    %c0_3 = arith.constant 0 : index
    %2 = vector.load %arg2[%c0_2, %c0_3] : memref<256x128xbf16, #tpu.memory_space<vmem>>, vector<256x128xbf16>
    %cst = arith.constant dense<0.000000e+00> : vector<128x128xf32>
    %3 = tpu.matmul %1, %2, %cst {dimension_numbers = #tpu.dot_dimension_numbers<[1], [0], [0], [1], [0, 0, 1, 1], [], []>} : vector<128x256xbf16>, vector<256x128xbf16>, vector<128x128xf32> -> vector<128x128xf32>
    %c0_4 = arith.constant 0 : index
    %c0_5 = arith.constant 0 : index
    %4 = vector.load %arg3[%c0_4, %c0_5] : memref<1x128xf32, #tpu.memory_space<vmem>>, vector<1x128xf32>
    %5 = vector.broadcast %4 : vector<1x128xf32> to vector<128x128xf32>
    %6 = arith.addf %3, %5 : vector<128x128xf32>
    %7 = math.tanh %6 : vector<128x128xf32>
    %8 = vector.shape_cast %7 : vector<128x128xf32> to vector<8x16x128xf32>
    %c0_6 = arith.constant 0 : index
    %c0_7 = arith.constant 0 : index
    %9 = vector.load %arg4[%c0_6, %c0_7] : memref<1x128xf32, #tpu.memory_space<vmem>>, vector<1x128xf32>
    %10 = vector.shape_cast %9 : vector<1x128xf32> to vector<1x1x128xf32>
    %11 = vector.broadcast %10 : vector<1x1x128xf32> to vector<8x16x128xf32>
    %12 = arith.mulf %8, %11 : vector<8x16x128xf32>
    %cst_8 = arith.constant dense<0.000000e+00> : vector<8x16xf32>
    %13 = vector.multi_reduction <add>, %12, %cst_8 [2] : vector<8x16x128xf32> to vector<8x16xf32>
    %c0_9 = arith.constant 0 : index
    %c0_10 = arith.constant 0 : index
    %14 = memref.load %arg5[%c0_9, %c0_10] : memref<1x1xf32, #tpu.memory_space<smem>>
    %15 = vector.broadcast %14 : f32 to vector<8x16xf32>
    %16 = arith.addf %13, %15 : vector<8x16xf32>
    %cst_11 = arith.constant dense<0xFF800000> : vector<8xf32>
    %17 = vector.multi_reduction <maximumf>, %16, %cst_11 [1] : vector<8x16xf32> to vector<8xf32>
    %18 = vector.shape_cast %17 : vector<8xf32> to vector<8x1xf32>
    %19 = vector.broadcast %18 : vector<8x1xf32> to vector<8x16xf32>
    %20 = arith.subf %16, %19 : vector<8x16xf32>
    %21 = math.exp %20 : vector<8x16xf32>
    %cst_12 = arith.constant dense<0.000000e+00> : vector<8xf32>
    %22 = vector.multi_reduction <add>, %21, %cst_12 [1] : vector<8x16xf32> to vector<8xf32>
    %23 = vector.shape_cast %22 : vector<8xf32> to vector<8x1xf32>
    %24 = vector.shape_cast %21 : vector<8x16xf32> to vector<8x16x1xf32>
    %c0_13 = arith.constant 0 : index
    %c0_14 = arith.constant 0 : index
    %c0_15 = arith.constant 0 : index
    %25 = vector.load %arg1[%c0_13, %c0_14, %c0_15] : memref<8x16x256xbf16, #tpu.memory_space<vmem>>, vector<8x16x256xbf16>
    %26 = arith.extf %25 : vector<8x16x256xbf16> to vector<8x16x256xf32>
    %27 = vector.broadcast %24 : vector<8x16x1xf32> to vector<8x16x256xf32>
    %28 = arith.mulf %27, %26 : vector<8x16x256xf32>
    %cst_16 = arith.constant dense<0.000000e+00> : vector<8x256xf32>
    %29 = vector.multi_reduction <add>, %28, %cst_16 [1] : vector<8x16x256xf32> to vector<8x256xf32>
    %cst_17 = arith.constant 1.000000e+00 : f32
    %30 = vector.broadcast %cst_17 : f32 to vector<8x1xf32>
    %31 = arith.divf %30, %23 : vector<8x1xf32>
    %32 = vector.broadcast %31 : vector<8x1xf32> to vector<8x256xf32>
    %33 = arith.mulf %29, %32 : vector<8x256xf32>
    %c0_18 = arith.constant 0 : index
    %c0_19 = arith.constant 0 : index
    %34 = vector.load %arg6[%c0_18, %c0_19] : memref<8x256xf32, #tpu.memory_space<vmem>>, vector<8x256xf32>
    tpu.vector_store %arg6[%c0_18, %c0_19], %33 {strides = array<i32>} : memref<8x256xf32, #tpu.memory_space<vmem>>, vector<8x256xf32>,
    return
  }
  func.func @transform_0(%arg0: i32) -> (i32, i32, i32) {
    %c0_i32 = arith.constant 0 : i32
    %c0_i32_0 = arith.constant 0 : i32
    %c0_i32_1 = arith.constant 0 : i32
    return %arg0, %c0_i32, %c0_i32_0 : i32, i32, i32
  }
  func.func @transform_1(%arg0: i32) -> (i32, i32) {
    %c0_i32 = arith.constant 0 : i32
    %c0_i32_0 = arith.constant 0 : i32
    %c0_i32_1 = arith.constant 0 : i32
    return %c0_i32, %c0_i32_0 : i32, i32
  }
  func.func @transform_2(%arg0: i32) -> (i32, i32) {
    %c0_i32 = arith.constant 0 : i32
    %c0_i32_0 = arith.constant 0 : i32
    %c0_i32_1 = arith.constant 0 : i32
    return %c0_i32, %c0_i32_0 : i32, i32
  }
  func.func @transform_3(%arg0: i32) -> (i32, i32) {
    %c0_i32 = arith.constant 0 : i32
    %c0_i32_0 = arith.constant 0 : i32
    %c0_i32_1 = arith.constant 0 : i32
    return %c0_i32, %c0_i32_0 : i32, i32
  }
  func.func @transform_4(%arg0: i32) -> (i32, i32) {
    %c0_i32 = arith.constant 0 : i32
    %c0_i32_0 = arith.constant 0 : i32
    %c0_i32_1 = arith.constant 0 : i32
    return %c0_i32, %c0_i32_0 : i32, i32
  }
  func.func @transform_5(%arg0: i32) -> (i32, i32) {
    %c0_i32 = arith.constant 0 : i32
    %c0_i32_0 = arith.constant 0 : i32
    return %arg0, %c0_i32 : i32, i32
  }
}

</mosaic_0001>

<llo_original>
// kernel: tpu_custom_call.1
$region0: #{tpu_custom_call.1}
  #allocation0 [shape = 'u32[]', space=smem, size = 0x4, offset = 0x4, fixed_abs, tag = 'smem constant byte address 0x4 - core index']
  #allocation1 [shape = 'u32[144,128]{1,0:T(1,128)}', space=vmem, size = 0x12000, scoped, tag = 'internal scratch']
  #allocation2 [shape = 'f32[1,1]{1,0:T(1,128)S(6)}', space=smem, size = 0x200, scoped, tag = 'scoped memory for tpu_custom_call.1']
  %s0 = inlined_call_operand.hbm [shape: bf16[16,16,256], index: 0, kind: input, shape index: {}]
  %s1 = inlined_call_operand.hbm [shape: bf16[256,128], index: 1, kind: input, shape index: {}]
  %s2 = inlined_call_operand.vmem [shape: f32[1,128], index: 2, kind: input, shape index: {}]
  %s3 = inlined_call_operand.vmem [shape: f32[1,128], index: 3, kind: input, shape index: {}]
  %s4 = inlined_call_operand.<no memory space> [shape: f32[1,1], index: 4, kind: input, shape index: {}]
  %s5 = inlined_call_operand.hbm [shape: f32[16,256], index: 5, kind: output, shape index: {}]
  %s6 = sld [smem:[#allocation0]]
  $region61: #{tpu_custom_call.1} parent=0
    _
  %s8 = ssub.s32 1, %s6
  %s9 = scalar_select 0, %s8, %s6
  %10 = sst [smem:[#allocation2]] %s4
  $region1: #{tpu_custom_call.1} parent=0
    #allocation3 [shape = 'u8[131072]{0}', space=vmem, size = 0x20000, scoped, tag = 'input window, operand 0']
    #allocation4 [shape = 's32[2]{0}', space=sflag, size = 0x8, scoped, tag = 'scoped memory for tpu_custom_call.1']
    #allocation5 [shape = 's32[2]{0}', space=sflag, size = 0x8, scoped, tag = 'scoped memory for tpu_custom_call.1']
    #allocation6 [shape = 'u8[65536]{0}', space=vmem, size = 0x10000, scoped, tag = 'input window, operand 1, single buffered']
    #allocation7 [shape = 's32[1]{0}', space=sflag, size = 0x4, scoped, tag = 'scoped memory for tpu_custom_call.1']
    #allocation8 [shape = 'u8[16384]{0}', space=vmem, size = 0x4000, scoped, tag = 'output window, operand 0']
    %11 = vsyncpa [#allocation4], 0
    %s12 = scalar_lea.sflag [#allocation4], 1
    %13 = vsyncpa %s12, 0
    %14 = vsyncpa [#allocation7], 0
    %15 = vsyncpa [#allocation5], 0
    %s16 = scalar_lea.sflag [#allocation5], 1
    %17 = vsyncpa %s16, 0
    loop: start=0, step=1, limit=4
    $region2: #{tpu_custom_call.1} parent=1 // loop_pre_header
      _
    $region3: #{tpu_custom_call.1} parent=1 // loop_header
      %s19 = sphi 0, %s23
      %p20 = scmp.ge.s32.totalorder %s19, 4
      %s29 = sphi 0, %s31
      %s32 = sphi 0, %s29
      %s33 = sphi 0, %s32
      %s49 = sphi 0, %s33
      %s53 = sphi 0, %s53
      %s55 = sphi 0, %s53
      %s56 = sphi 0, %s55
      %s70 = sphi 0, %s56
      %s74 = sphi 0, %s74
      %s76 = sphi 0, %s74
      %s77 = sphi 0, %s76
      %s91 = sphi 0, %s77
      %s95 = sphi 0, %s95
      %s97 = sphi 0, %s95
      %s98 = sphi 0, %s97
      %s112 = sphi 0, %s98
      %s116 = sphi 0, %s116
      %s118 = sphi 0, %s116
      %s119 = sphi 0, %s118
      %s133 = sphi 0, %s119
      %s139 = sphi 0, %s141
      %s142 = sphi 0, %s139
      %s143 = sphi 0, %s142
      %s159 = sphi 0, %s143
    $region4: #{tpu_custom_call.1} parent=1 // loop_header_branch
      %22 = sbr.rel (%p20) target = $region8
    $region5: #{tpu_custom_call.1} parent=1 // loop_body
      %s24 = ssub.s32 %s19, 1
      %s25 = ssub.s32 %s19, 2
      %s26 = sadd.s32 %s19, 1
      %s27 = ssub.s32 %s19, %s26
      %p28 = scmp.eq.s32.totalorder %s27, 0
      %s30 = sadd.s32 %s29, 1
      %s31 = scalar_select %p28, %s29, %s30
      %p34 = pneg %p28
      %p35 = scmp.eq.s32.totalorder %s19, 1
      %p36 = por %p34, %p35
      %p37 = scmp.ne.s32.totalorder %s29, %s32
      %p38 = scmp.eq.s32.totalorder %s19, 0
      %p39 = por %p37, %p38
      %p40 = scmp.ne.s32.totalorder %s29, %s32
      %p41 = scmp.eq.s32.totalorder %s24, 1
      %p42 = por %p40, %p41
      %p43 = scmp.ne.s32.totalorder %s32, %s33
      %p44 = scmp.eq.s32.totalorder %s24, 0
      %p45 = por %p43, %p44
      %p46 = scmp.ne.s32.totalorder %s32, %s33
      %p47 = scmp.eq.s32.totalorder %s25, 1
      %p48 = por %p46, %p47
      %p50 = scmp.ne.s32.totalorder %s33, %s49
      %p51 = scmp.eq.s32.totalorder %s25, 0
      %p52 = por %p50, %p51
      %s54 = sadd.s32 %s53, 1
      %p57 = scmp.eq.s32.totalorder %s19, 1
      %p58 = scmp.ne.s32.totalorder %s53, %s55
      %p59 = scmp.eq.s32.totalorder %s19, 0
      %p60 = por %p58, %p59
      %p61 = scmp.ne.s32.totalorder %s53, %s55
      %p62 = scmp.eq.s32.totalorder %s24, 1
      %p63 = por %p61, %p62
      %p64 = scmp.ne.s32.totalorder %s55, %s56
      %p65 = scmp.eq.s32.totalorder %s24, 0
      %p66 = por %p64, %p65
      %p67 = scmp.ne.s32.totalorder %s55, %s56
      %p68 = scmp.eq.s32.totalorder %s25, 1
      %p69 = por %p67, %p68
      %p71 = scmp.ne.s32.totalorder %s56, %s70
      %p72 = scmp.eq.s32.totalorder %s25, 0
      %p73 = por %p71, %p72
      %s75 = sadd.s32 %s74, 1
      %p78 = scmp.eq.s32.totalorder %s19, 1
      %p79 = scmp.ne.s32.totalorder %s74, %s76
      %p80 = scmp.eq.s32.totalorder %s19, 0
      %p81 = por %p79, %p80
      %p82 = scmp.ne.s32.totalorder %s74, %s76
      %p83 = scmp.eq.s32.totalorder %s24, 1
      %p84 = por %p82, %p83
      %p85 = scmp.ne.s32.totalorder %s76, %s77
      %p86 = scmp.eq.s32.totalorder %s24, 0
      %p87 = por %p85, %p86
      %p88 = scmp.ne.s32.totalorder %s76, %s77
      %p89 = scmp.eq.s32.totalorder %s25, 1
      %p90 = por %p88, %p89
      %p92 = scmp.ne.s32.totalorder %s77, %s91
      %p93 = scmp.eq.s32.totalorder %s25, 0
      %p94 = por %p92, %p93
      %s96 = sadd.s32 %s95, 1
      %p99 = scmp.eq.s32.totalorder %s19, 1
      %p100 = scmp.ne.s32.totalorder %s95, %s97
      %p101 = scmp.eq.s32.totalorder %s19, 0
      %p102 = por %p100, %p101
      %p103 = scmp.ne.s32.totalorder %s95, %s97
      %p104 = scmp.eq.s32.totalorder %s24, 1
      %p105 = por %p103, %p104
      %p106 = scmp.ne.s32.totalorder %s97, %s98
      %p107 = scmp.eq.s32.totalorder %s24, 0
      %p108 = por %p106, %p107
      %p109 = scmp.ne.s32.totalorder %s97, %s98
      %p110 = scmp.eq.s32.totalorder %s25, 1
      %p111 = por %p109, %p110
      %p113 = scmp.ne.s32.totalorder %s98, %s112
      %p114 = scmp.eq.s32.totalorder %s25, 0
      %p115 = por %p113, %p114
      %s117 = sadd.s32 %s116, 1
      %p120 = scmp.eq.s32.totalorder %s19, 1
      %p121 = scmp.ne.s32.totalorder %s116, %s118
      %p122 = scmp.eq.s32.totalorder %s19, 0
      %p123 = por %p121, %p122
      %p124 = scmp.ne.s32.totalorder %s116, %s118
      %p125 = scmp.eq.s32.totalorder %s24, 1
      %p126 = por %p124, %p125
      %p127 = scmp.ne.s32.totalorder %s118, %s119
      %p128 = scmp.eq.s32.totalorder %s24, 0
      %p129 = por %p127, %p128
      %p130 = scmp.ne.s32.totalorder %s118, %s119
      %p131 = scmp.eq.s32.totalorder %s25, 1
      %p132 = por %p130, %p131
      %p134 = scmp.ne.s32.totalorder %s119, %s133
      %p135 = scmp.eq.s32.totalorder %s25, 0
      %p136 = por %p134, %p135
      %s137 = ssub.s32 %s19, %s26
      %p138 = scmp.eq.s32.totalorder %s137, 0
      %s140 = sadd.s32 %s139, 1
      %s141 = scalar_select %p138, %s139, %s140
      %p144 = pneg %p138
      %p145 = scmp.eq.s32.totalorder %s19, 1
      %p146 = por %p144, %p145
      %p147 = scmp.ne.s32.totalorder %s139, %s142
      %p148 = scmp.eq.s32.totalorder %s19, 0
      %p149 = por %p147, %p148
      %p150 = scmp.ne.s32.totalorder %s139, %s142
      %p151 = scmp.eq.s32.totalorder %s24, 1
      %p152 = por %p150, %p151
      %p153 = scmp.ne.s32.totalorder %s142, %s143
      %p154 = scmp.eq.s32.totalorder %s24, 0
      %p155 = por %p153, %p154
      %p156 = scmp.ne.s32.totalorder %s142, %s143
      %p157 = scmp.eq.s32.totalorder %s25, 1
      %p158 = por %p156, %p157
      %p160 = scmp.ne.s32.totalorder %s143, %s159
      %p161 = scmp.eq.s32.totalorder %s25, 0
      %p162 = por %p160, %p161
      %p163 = scmp.le.s32.totalorder 1, %s19
      %p164 = scmp.lt.s32.totalorder %s19, 3
      %p165 = pnand %p163, %p164
      %p166 = pneg %p165
      // Predicated region
      $region9: #{tpu_custom_call.1} parent=5 // pred_check
        _
      $region10: #{tpu_custom_call.1} parent=5 // pred_check_branch
        %168 = sbr.rel (%p165) target = $region12
      $region11: #{tpu_custom_call.1} parent=5 // pred_region
        %s169 = ssub.s32 %s19, 1
        // Predicated region
        $region13: #{tpu_custom_call.1} parent=11 // pred_check
          %p170 = pneg %p66
        $region14: #{tpu_custom_call.1} parent=11 // pred_check_branch
          %172 = sbr.rel (%p170) target = $region16
        $region15: #{tpu_custom_call.1} parent=11 // pred_region
          %s174 = ssub.s32 2048, 2048
          %175 = vsyncadd [#allocation7], %s174
          %s176 = sshll.u32 [#allocation6], 4
          %s177 = int_to_ptr.vmem [resolvable:$true] %s176
          %182 = dma.hbm_to_vmem [thread:$0]  %s1, 2048, %s177, [#allocation7], 64, 64, 4
        $region16: #{tpu_custom_call.1} parent=11 // pred_fallthru
          _
        // Predicated region
        $region17: #{tpu_custom_call.1} parent=11 // pred_check
          %p183 = pneg %p87
        $region18: #{tpu_custom_call.1} parent=11 // pred_check_branch
          %185 = sbr.rel (%p183) target = $region20
        $region19: #{tpu_custom_call.1} parent=11 // pred_region
          _
        $region20: #{tpu_custom_call.1} parent=11 // pred_fallthru
          _
        // Predicated region
        $region21: #{tpu_custom_call.1} parent=11 // pred_check
          %p186 = pneg %p108
        $region22: #{tpu_custom_call.1} parent=11 // pred_check_branch
          %188 = sbr.rel (%p186) target = $region24
        $region23: #{tpu_custom_call.1} parent=11 // pred_region
          _
        $region24: #{tpu_custom_call.1} parent=11 // pred_fallthru
          _
        // Predicated region
        $region25: #{tpu_custom_call.1} parent=11 // pred_check
          %p189 = pneg %p129
        $region26: #{tpu_custom_call.1} parent=11 // pred_check_branch
          %191 = sbr.rel (%p189) target = $region28
        $region27: #{tpu_custom_call.1} parent=11 // pred_region
          _
        $region28: #{tpu_custom_call.1} parent=11 // pred_fallthru
          _
      $region12: #{tpu_custom_call.1} parent=5 // pred_fallthru
        _
      %p192 = scmp.lt.s32.totalorder %s19, 2
      // Predicated region
      $region29: #{tpu_custom_call.1} parent=5 // pred_check
        %p193 = pneg %p192
      $region30: #{tpu_custom_call.1} parent=5 // pred_check_branch
        %195 = sbr.rel (%p193) target = $region32
      $region31: #{tpu_custom_call.1} parent=5 // pred_region
        // Predicated region
        $region33: #{tpu_custom_call.1} parent=31 // pred_check
          %p196 = pneg %p39
        $region34: #{tpu_custom_call.1} parent=31 // pred_check_branch
          %198 = sbr.rel (%p196) target = $region36
        $region35: #{tpu_custom_call.1} parent=31 // pred_region
          %s199 = sand.u32 %s29, 1
          %s200 = scalar_lea.sflag [#allocation4], %s199
          %s201 = sand.u32 %s29, 1
          %s202 = smul.addr %s201, 128
          %s203 = scalar_lea.vmem [#allocation3], %s202
          %s204 = smul.u32 8, %s19
          %s206 = ssub.s32 2048, 2048
          %207 = vsyncadd %s200, %s206
          %s208 = smul.addr %s204, 4
          %s209 = smul.addr %s208, 64
          %s210 = scalar_lea.hbm %s0, %s209
          %s211 = sshll.u32 %s203, 4
          %s212 = int_to_ptr.vmem [resolvable:$true] %s211
          %217 = dma.hbm_to_vmem [thread:$0]  %s210, 2048, %s212, %s200, 128, 128, 8
        $region36: #{tpu_custom_call.1} parent=31 // pred_fallthru
          _
      $region32: #{tpu_custom_call.1} parent=5 // pred_fallthru
        _
      %p218 = scmp.le.s32.totalorder 1, %s19
      %p219 = scmp.lt.s32.totalorder %s19, 3
      %p220 = pnand %p218, %p219
      %p221 = pneg %p220
      // Predicated region
      $region37: #{tpu_custom_call.1} parent=5 // pred_check
        _
      $region38: #{tpu_custom_call.1} parent=5 // pred_check_branch
        %223 = sbr.rel (%p220) target = $region40
      $region39: #{tpu_custom_call.1} parent=5 // pred_region
        %s224 = ssub.s32 %s19, 1
        %s225 = sand.u32 %s32, 1
        %s226 = scalar_lea.sflag [#allocation4], %s225
        %s227 = sand.u32 %s32, 1
        %s228 = smul.addr %s227, 128
        %s229 = scalar_lea.vmem [#allocation3], %s228
        // Predicated region
        $region41: #{tpu_custom_call.1} parent=39 // pred_check
          %p230 = pneg %p45
        $region42: #{tpu_custom_call.1} parent=39 // pred_check_branch
          %232 = sbr.rel (%p230) target = $region44
        $region43: #{tpu_custom_call.1} parent=39 // pred_region
          %233 = dma.done %s226, 2048
        $region44: #{tpu_custom_call.1} parent=39 // pred_fallthru
          _
        // Predicated region
        $region45: #{tpu_custom_call.1} parent=39 // pred_check
          %p234 = pneg %p66
        $region46: #{tpu_custom_call.1} parent=39 // pred_check_branch
          %236 = sbr.rel (%p234) target = $region48
        $region47: #{tpu_custom_call.1} parent=39 // pred_region
          %237 = dma.done [#allocation7], 2048
        $region48: #{tpu_custom_call.1} parent=39 // pred_fallthru
          _
        %s238 = sand.u32 %s32, 1
        %s239 = scalar_lea.sflag [#allocation4], %s238
        %s240 = sand.u32 %s32, 1
        %s241 = smul.addr %s240, 128
        %s242 = scalar_lea.vmem [#allocation3], %s241
        %p243 = pneg %p45
        %p244 = pneg %p42
        %p245 = pneg %p66
        %p246 = pneg %p63
        %p247 = pneg %p87
        %p248 = pneg %p84
        %p249 = pneg %p108
        %p250 = pneg %p105
        %p251 = pneg %p129
        %p252 = pneg %p126
        %p253 = pneg %p155
        %p254 = pneg %p152
        %s255 = sand.u32 %s142, 1
        %s256 = scalar_lea.sflag [#allocation5], %s255
        %s257 = sand.u32 %s142, 1
        %s258 = smul.addr %s257, 16
        %s259 = scalar_lea.vmem [#allocation8], %s258
        %s260 = smul.u32 8, %s24
        %v262 = vld [vmem:[%s229] sm:$0xff]
        %v263 = vld [vmem:[%s229 + $0x8] sm:$0xff]
        %v264 = vld [vmem:[%s229 + $0x10] sm:$0xff]
        %v265 = vld [vmem:[%s229 + $0x18] sm:$0xff]
        %v266 = vld [vmem:[%s229 + $0x20] sm:$0xff]
        %v267 = vld [vmem:[%s229 + $0x28] sm:$0xff]
        %v268 = vld [vmem:[%s229 + $0x30] sm:$0xff]
        %v269 = vld [vmem:[%s229 + $0x38] sm:$0xff]
        %v270 = vld [vmem:[%s229 + $0x40] sm:$0xff]
        %v271 = vld [vmem:[%s229 + $0x48] sm:$0xff]
        %v272 = vld [vmem:[%s229 + $0x50] sm:$0xff]
        %v273 = vld [vmem:[%s229 + $0x58] sm:$0xff]
        %v274 = vld [vmem:[%s229 + $0x60] sm:$0xff]
        %v275 = vld [vmem:[%s229 + $0x68] sm:$0xff]
        %v276 = vld [vmem:[%s229 + $0x70] sm:$0xff]
        %v277 = vld [vmem:[%s229 + $0x78] sm:$0xff]
        %v278 = vld [vmem:[#allocation6] sm:$0xf]
        %v279 = vld [vmem:[#allocation6 + $0x4] sm:$0xf]
        %v280 = vld [vmem:[#allocation6 + $0x8] sm:$0xf]
        %v281 = vld [vmem:[#allocation6 + $0xc] sm:$0xf]
        %v282 = vld [vmem:[#allocation6 + $0x10] sm:$0xf]
        %v283 = vld [vmem:[#allocation6 + $0x14] sm:$0xf]
        %v284 = vld [vmem:[#allocation6 + $0x18] sm:$0xf]
        %v285 = vld [vmem:[#allocation6 + $0x1c] sm:$0xf]
        %v286 = vld [vmem:[#allocation6 + $0x20] sm:$0xf]
        %v287 = vld [vmem:[#allocation6 + $0x24] sm:$0xf]
        %v288 = vld [vmem:[#allocation6 + $0x28] sm:$0xf]
        %v289 = vld [vmem:[#allocation6 + $0x2c] sm:$0xf]
        %v290 = vld [vmem:[#allocation6 + $0x30] sm:$0xf]
        %v291 = vld [vmem:[#allocation6 + $0x34] sm:$0xf]
        %v292 = vld [vmem:[#allocation6 + $0x38] sm:$0xf]
        %v293 = vld [vmem:[#allocation6 + $0x3c] sm:$0xf]
        %v294 = vld [vmem:[#allocation6 + $0x40] sm:$0xf]
        %v295 = vld [vmem:[#allocation6 + $0x44] sm:$0xf]
        %v296 = vld [vmem:[#allocation6 + $0x48] sm:$0xf]
        %v297 = vld [vmem:[#allocation6 + $0x4c] sm:$0xf]
        %v298 = vld [vmem:[#allocation6 + $0x50] sm:$0xf]
        %v299 = vld [vmem:[#allocation6 + $0x54] sm:$0xf]
        %v300 = vld [vmem:[#allocation6 + $0x58] sm:$0xf]
        %v301 = vld [vmem:[#allocation6 + $0x5c] sm:$0xf]
        %v302 = vld [vmem:[#allocation6 + $0x60] sm:$0xf]
        %v303 = vld [vmem:[#allocation6 + $0x64] sm:$0xf]
        %v304 = vld [vmem:[#allocation6 + $0x68] sm:$0xf]
        %v305 = vld [vmem:[#allocation6 + $0x6c] sm:$0xf]
        %v306 = vld [vmem:[#allocation6 + $0x70] sm:$0xf]
        %v307 = vld [vmem:[#allocation6 + $0x74] sm:$0xf]
        %v308 = vld [vmem:[#allocation6 + $0x78] sm:$0xf]
        %v309 = vld [vmem:[#allocation6 + $0x7c] sm:$0xf]
        %v310 = vld [vmem:[%s2] sm:$0x1]
        %v312 = vlaneseq
        %v313 = vshrl.u32 %v312, 7
        %v314 = vsub.s32 0, %v313
        %v315 = vrot.slane %v310, %v314
        %v333 = vunpack.c.l.b16 %v262
        %v334 = vunpack.c.h.b16 %v262
        %v335 = vunpack.c.l.b16 %v263
        %v336 = vunpack.c.h.b16 %v263
        %v337 = vunpack.c.l.b16 %v264
        %v338 = vunpack.c.h.b16 %v264
        %v339 = vunpack.c.l.b16 %v265
        %v340 = vunpack.c.h.b16 %v265
        %v341 = vunpack.c.l.b16 %v266
        %v342 = vunpack.c.h.b16 %v266
        %v343 = vunpack.c.l.b16 %v267
        %v344 = vunpack.c.h.b16 %v267
        %v345 = vunpack.c.l.b16 %v268
        %v346 = vunpack.c.h.b16 %v268
        %v347 = vunpack.c.l.b16 %v269
        %v348 = vunpack.c.h.b16 %v269
        %v349 = vunpack.c.l.b16 %v270
        %v350 = vunpack.c.h.b16 %v270
        %v351 = vunpack.c.l.b16 %v271
        %v352 = vunpack.c.h.b16 %v271
        %v353 = vunpack.c.l.b16 %v272
        %v354 = vunpack.c.h.b16 %v272
        %v355 = vunpack.c.l.b16 %v273
        %v356 = vunpack.c.h.b16 %v273
        %v357 = vunpack.c.l.b16 %v274
        %v358 = vunpack.c.h.b16 %v274
        %v359 = vunpack.c.l.b16 %v275
        %v360 = vunpack.c.h.b16 %v275
        %v361 = vunpack.c.l.b16 %v276
        %v362 = vunpack.c.h.b16 %v276
        %v363 = vunpack.c.l.b16 %v277
        %v364 = vunpack.c.h.b16 %v277
        %v365 = vpack.c.b16 %v335, %v333
        %v366 = vpack.c.b16 %v336, %v334
        %v367 = vpack.c.b16 %v339, %v337
        %v368 = vpack.c.b16 %v340, %v338
        %v369 = vpack.c.b16 %v343, %v341
        %v370 = vpack.c.b16 %v344, %v342
        %v371 = vpack.c.b16 %v347, %v345
        %v372 = vpack.c.b16 %v348, %v346
        %v373 = vpack.c.b16 %v351, %v349
        %v374 = vpack.c.b16 %v352, %v350
        %v375 = vpack.c.b16 %v355, %v353
        %v376 = vpack.c.b16 %v356, %v354
        %v377 = vpack.c.b16 %v359, %v357
        %v378 = vpack.c.b16 %v360, %v358
        %v379 = vpack.c.b16 %v363, %v361
        %v380 = vpack.c.b16 %v364, %v362
        %v429 = vunpack.c.l.b16 %v278
        %v430 = vunpack.c.l.b16 %v279
        %v431 = vunpack.c.l.b16 %v280
        %v432 = vunpack.c.l.b16 %v281
        %v433 = vunpack.c.l.b16 %v282
        %v434 = vunpack.c.l.b16 %v283
        %v435 = vunpack.c.l.b16 %v284
        %v436 = vunpack.c.l.b16 %v285
        %v437 = vunpack.c.l.b16 %v286
        %v438 = vunpack.c.l.b16 %v287
        %v439 = vunpack.c.l.b16 %v288
        %v440 = vunpack.c.l.b16 %v289
        %v441 = vunpack.c.l.b16 %v290
        %v442 = vunpack.c.l.b16 %v291
        %v443 = vunpack.c.l.b16 %v292
        %v444 = vunpack.c.l.b16 %v293
        %v445 = vunpack.c.l.b16 %v294
        %v446 = vunpack.c.l.b16 %v295
        %v447 = vunpack.c.l.b16 %v296
        %v448 = vunpack.c.l.b16 %v297
        %v449 = vunpack.c.l.b16 %v298
        %v450 = vunpack.c.l.b16 %v299
        %v451 = vunpack.c.l.b16 %v300
        %v452 = vunpack.c.l.b16 %v301
        %v453 = vunpack.c.l.b16 %v302
        %v454 = vunpack.c.l.b16 %v303
        %v455 = vunpack.c.l.b16 %v304
        %v456 = vunpack.c.l.b16 %v305
        %v457 = vunpack.c.l.b16 %v306
        %v458 = vunpack.c.l.b16 %v307
        %v459 = vunpack.c.l.b16 %v308
        %v460 = vunpack.c.l.b16 %v309
        %v461 = vpack.c.b16 %v430, %v429
        %v462 = vpack.c.b16 %v432, %v431
        %v463 = vpack.c.b16 %v434, %v433
        %v464 = vpack.c.b16 %v436, %v435
        %v465 = vpack.c.b16 %v438, %v437
        %v466 = vpack.c.b16 %v440, %v439
        %v467 = vpack.c.b16 %v442, %v441
        %v468 = vpack.c.b16 %v444, %v443
        %v469 = vpack.c.b16 %v446, %v445
        %v470 = vpack.c.b16 %v448, %v447
        %v471 = vpack.c.b16 %v450, %v449
        %v472 = vpack.c.b16 %v452, %v451
        %v473 = vpack.c.b16 %v454, %v453
        %v474 = vpack.c.b16 %v456, %v455
        %v475 = vpack.c.b16 %v458, %v457
        %v476 = vpack.c.b16 %v460, %v459
        %493 = vmatprep.subr.bf16.mxu0 0
        %494 = vmatpush1.bf16.msra.mxu0 %v461
        %495 = vmatprep.subr.bf16.mxu0 0
        %496 = vmatpush1.bf16.msra.mxu0 %v462
        %497 = vmatprep.subr.bf16.mxu0 0
        %498 = vmatpush1.bf16.msra.mxu0 %v463
        %499 = vmatprep.subr.bf16.mxu0 0
        %500 = vmatpush1.bf16.msra.mxu0 %v464
        %501 = vmatprep.subr.bf16.mxu0 0
        %502 = vmatpush1.bf16.msra.mxu0 %v465
        %503 = vmatprep.subr.bf16.mxu0 0
        %504 = vmatpush1.bf16.msra.mxu0 %v466
        %505 = vmatprep.subr.bf16.mxu0 0
        %506 = vmatpush1.bf16.msra.mxu0 %v467
        %507 = vmatprep.subr.bf16.mxu0 0
        %508 = vmatpush1.bf16.msra.mxu0 %v468
        %509 = vmatprep.subr.bf16.mxu0 0
        %510 = vmatpush1.bf16.msra.mxu0 %v469
        %511 = vmatprep.subr.bf16.mxu0 0
        %512 = vmatpush1.bf16.msra.mxu0 %v470
        %513 = vmatprep.subr.bf16.mxu0 0
        %514 = vmatpush1.bf16.msra.mxu0 %v471
        %515 = vmatprep.subr.bf16.mxu0 0
        %516 = vmatpush1.bf16.msra.mxu0 %v472
        %517 = vmatprep.subr.bf16.mxu0 0
        %518 = vmatpush1.bf16.msra.mxu0 %v473
        %519 = vmatprep.subr.bf16.mxu0 0
        %520 = vmatpush1.bf16.msra.mxu0 %v474
        %521 = vmatprep.subr.bf16.mxu0 0
        %522 = vmatpush1.bf16.msra.mxu0 %v475
        %523 = vmatprep.subr.bf16.mxu0 0
        %524 = vmatpush1.bf16.msra.mxu0 %v476
        %525 = vmatprep.mubr.bf16.mxu0 %v366
        %526 = vmatmul.mubr.bf16.gmra.mrb[0].mxu0 %v365
        %v527 = vpop.f32.mrb[0].mxu0
        %v528 = vadd.f32 %v315, %v527
        %v529 = vpop.f32.mrb[0].mxu0
        %v530 = vpop.f32.mrb[0].mxu0
        %v531 = vadd.f32 %v315, %v530
        %v532 = vpop.f32.mrb[0].mxu0
        %533 = vmatprep.mubr.bf16.mxu0 %v368
        %534 = vmatmul.mubr.bf16.gmra.mrb[0].mxu0 %v367
        %v535 = vpop.f32.mrb[0].mxu0
        %v536 = vadd.f32 %v315, %v535
        %v537 = vpop.f32.mrb[0].mxu0
        %v538 = vpop.f32.mrb[0].mxu0
        %v539 = vadd.f32 %v315, %v538
        %v540 = vpop.f32.mrb[0].mxu0
        %541 = vmatprep.mubr.bf16.mxu0 %v370
        %542 = vmatmul.mubr.bf16.gmra.mrb[0].mxu0 %v369
        %v543 = vpop.f32.mrb[0].mxu0
        %v544 = vadd.f32 %v315, %v543
        %v545 = vpop.f32.mrb[0].mxu0
        %v546 = vpop.f32.mrb[0].mxu0
        %v547 = vadd.f32 %v315, %v546
        %v548 = vpop.f32.mrb[0].mxu0
        %549 = vmatprep.mubr.bf16.mxu0 %v372
        %550 = vmatmul.mubr.bf16.gmra.mrb[0].mxu0 %v371
        %v551 = vpop.f32.mrb[0].mxu0
        %v552 = vadd.f32 %v315, %v551
        %v553 = vpop.f32.mrb[0].mxu0
        %v554 = vpop.f32.mrb[0].mxu0
        %v555 = vadd.f32 %v315, %v554
        %v556 = vpop.f32.mrb[0].mxu0
        %557 = vmatprep.mubr.bf16.mxu0 %v374
        %558 = vmatmul.mubr.bf16.gmra.mrb[0].mxu0 %v373
        %v559 = vpop.f32.mrb[0].mxu0
        %v560 = vadd.f32 %v315, %v559
        %v561 = vpop.f32.mrb[0].mxu0
        %v562 = vpop.f32.mrb[0].mxu0
        %v563 = vadd.f32 %v315, %v562
        %v564 = vpop.f32.mrb[0].mxu0
        %565 = vmatprep.mubr.bf16.mxu0 %v376
        %566 = vmatmul.mubr.bf16.gmra.mrb[0].mxu0 %v375
        %v567 = vpop.f32.mrb[0].mxu0
        %v568 = vadd.f32 %v315, %v567
        %v569 = vpop.f32.mrb[0].mxu0
        %v570 = vpop.f32.mrb[0].mxu0
        %v571 = vadd.f32 %v315, %v570
        %v572 = vpop.f32.mrb[0].mxu0
        %573 = vmatprep.mubr.bf16.mxu0 %v378
        %574 = vmatmul.mubr.bf16.gmra.mrb[0].mxu0 %v377
        %v575 = vpop.f32.mrb[0].mxu0
        %v576 = vadd.f32 %v315, %v575
        %v577 = vpop.f32.mrb[0].mxu0
        %v578 = vpop.f32.mrb[0].mxu0
        %v579 = vadd.f32 %v315, %v578
        %v580 = vpop.f32.mrb[0].mxu0
        %581 = vmatprep.mubr.bf16.mxu0 %v380
        %582 = vmatmul.mubr.bf16.gmra.mrb[0].mxu0 %v379
        %v583 = vpop.f32.mrb[0].mxu0
        %v584 = vadd.f32 %v315, %v583
        %v585 = vpop.f32.mrb[0].mxu0
        %v586 = vpop.f32.mrb[0].mxu0
        %v587 = vadd.f32 %v315, %v586
        %v588 = vpop.f32.mrb[0].mxu0
        %589 = vdwg.mxu0
        %v590 = vtanh.pop %v528
        %v591 = vtanh.pop %v531
        %v592 = vtanh.pop %v536
        %v593 = vtanh.pop %v539
        %v594 = vtanh.pop %v544
        %v595 = vtanh.pop %v547
        %v596 = vtanh.pop %v552
        %v597 = vtanh.pop %v555
        %v598 = vtanh.pop %v560
        %v599 = vtanh.pop %v563
        %v600 = vtanh.pop %v568
        %v601 = vtanh.pop %v571
        %v602 = vtanh.pop %v576
        %v603 = vtanh.pop %v579
        %v604 = vtanh.pop %v584
        %v605 = vtanh.pop %v587
        %v606 = vld [vmem:[%s3] sm:$0x1]
        %v608 = vlaneseq
        %v609 = vshrl.u32 %v608, 7
        %v610 = vsub.s32 0, %v609
        %v611 = vrot.slane %v606, %v610
        %v613 = vmul.f32 %v590, %v611
        %v614 = vmul.f32 %v591, %v611
        %v615 = vmul.f32 %v592, %v611
        %v616 = vmul.f32 %v593, %v611
        %v617 = vmul.f32 %v594, %v611
        %v618 = vmul.f32 %v595, %v611
        %v619 = vmul.f32 %v596, %v611
        %v620 = vmul.f32 %v597, %v611
        %v621 = vmul.f32 %v598, %v611
        %v622 = vmul.f32 %v599, %v611
        %v623 = vmul.f32 %v600, %v611
        %v624 = vmul.f32 %v601, %v611
        %v625 = vmul.f32 %v602, %v611
        %v626 = vmul.f32 %v603, %v611
        %v627 = vmul.f32 %v604, %v611
        %v628 = vmul.f32 %v605, %v611
        %629 = vadd.xlane.f32.xlu0 %v613
        %v630 = vpop.xlane.xlu0 %629
        %631 = vadd.xlane.f32.xlu0 %v614
        %v632 = vpop.xlane.xlu0 %631
        %633 = vadd.xlane.f32.xlu0 %v615
        %v634 = vpop.xlane.xlu0 %633
        %635 = vadd.xlane.f32.xlu0 %v616
        %v636 = vpop.xlane.xlu0 %635
        %637 = vadd.xlane.f32.xlu0 %v617
        %v638 = vpop.xlane.xlu0 %637
        %639 = vadd.xlane.f32.xlu0 %v618
        %v640 = vpop.xlane.xlu0 %639
        %641 = vadd.xlane.f32.xlu0 %v619
        %v642 = vpop.xlane.xlu0 %641
        %643 = vadd.xlane.f32.xlu0 %v620
        %v644 = vpop.xlane.xlu0 %643
        %645 = vadd.xlane.f32.xlu0 %v621
        %v646 = vpop.xlane.xlu0 %645
        %647 = vadd.xlane.f32.xlu0 %v622
        %v648 = vpop.xlane.xlu0 %647
        %649 = vadd.xlane.f32.xlu0 %v623
        %v650 = vpop.xlane.xlu0 %649
        %651 = vadd.xlane.f32.xlu0 %v624
        %v652 = vpop.xlane.xlu0 %651
        %653 = vadd.xlane.f32.xlu0 %v625
        %v654 = vpop.xlane.xlu0 %653
        %655 = vadd.xlane.f32.xlu0 %v626
        %v656 = vpop.xlane.xlu0 %655
        %657 = vadd.xlane.f32.xlu0 %v627
        %v658 = vpop.xlane.xlu0 %657
        %659 = vadd.xlane.f32.xlu0 %v628
        %v660 = vpop.xlane.xlu0 %659
        %s661 = sld [smem:[#allocation2]]
        %v662 = vstv %s661
        %v663 = vadd.f32 %v630, %v662
        %v664 = vadd.f32 %v632, %v662
        %v665 = vadd.f32 %v634, %v662
        %v666 = vadd.f32 %v636, %v662
        %v667 = vadd.f32 %v638, %v662
        %v668 = vadd.f32 %v640, %v662
        %v669 = vadd.f32 %v642, %v662
        %v670 = vadd.f32 %v644, %v662
        %v671 = vadd.f32 %v646, %v662
        %v672 = vadd.f32 %v648, %v662
        %v673 = vadd.f32 %v650, %v662
        %v674 = vadd.f32 %v652, %v662
        %v675 = vadd.f32 %v654, %v662
        %v676 = vadd.f32 %v656, %v662
        %v677 = vadd.f32 %v658, %v662
        %v678 = vadd.f32 %v660, %v662
        %v695 = vlaneseq
        %v696 = vand.u32 %v695, 127
        %v697 = vlaneseq
        %v698 = vshrl.u32 %v697, 7
        %v699 = vsub.s32 %v696, %v698
        %v700 = vrot.slane %v663, %v699
        %v701 = vadd.s32 %v696, 4294967288
        %v702 = vlaneseq
        %v703 = vshrl.u32 %v702, 7
        %v704 = vsub.s32 %v701, %v703
        %v705 = vrot.slane %v664, %v704
        %vm706 = vcmask 130112
        %v707 = vsel %vm706, %v705, %v700
        %v708 = vlaneseq
        %v709 = vshrl.u32 %v708, 7
        %v710 = vsub.s32 %v696, %v709
        %v711 = vrot.slane %v665, %v710
        %v712 = vlaneseq
        %v713 = vshrl.u32 %v712, 7
        %v714 = vsub.s32 %v701, %v713
        %v715 = vrot.slane %v666, %v714
        %v716 = vsel %vm706, %v715, %v711
        %v717 = vlaneseq
        %v718 = vshrl.u32 %v717, 7
        %v719 = vsub.s32 %v696, %v718
        %v720 = vrot.slane %v667, %v719
        %v721 = vlaneseq
        %v722 = vshrl.u32 %v721, 7
        %v723 = vsub.s32 %v701, %v722
        %v724 = vrot.slane %v668, %v723
        %v725 = vsel %vm706, %v724, %v720
        %v726 = vlaneseq
        %v727 = vshrl.u32 %v726, 7
        %v728 = vsub.s32 %v696, %v727
        %v729 = vrot.slane %v669, %v728
        %v730 = vlaneseq
        %v731 = vshrl.u32 %v730, 7
        %v732 = vsub.s32 %v701, %v731
        %v733 = vrot.slane %v670, %v732
        %v734 = vsel %vm706, %v733, %v729
        %v735 = vlaneseq
        %v736 = vshrl.u32 %v735, 7
        %v737 = vsub.s32 %v696, %v736
        %v738 = vrot.slane %v671, %v737
        %v739 = vlaneseq
        %v740 = vshrl.u32 %v739, 7
        %v741 = vsub.s32 %v701, %v740
        %v742 = vrot.slane %v672, %v741
        %v743 = vsel %vm706, %v742, %v738
        %v744 = vlaneseq
        %v745 = vshrl.u32 %v744, 7
        %v746 = vsub.s32 %v696, %v745
        %v747 = vrot.slane %v673, %v746
        %v748 = vlaneseq
        %v749 = vshrl.u32 %v748, 7
        %v750 = vsub.s32 %v701, %v749
        %v751 = vrot.slane %v674, %v750
        %v752 = vsel %vm706, %v751, %v747
        %v753 = vlaneseq
        %v754 = vshrl.u32 %v753, 7
        %v755 = vsub.s32 %v696, %v754
        %v756 = vrot.slane %v675, %v755
        %v757 = vlaneseq
        %v758 = vshrl.u32 %v757, 7
        %v759 = vsub.s32 %v701, %v758
        %v760 = vrot.slane %v676, %v759
        %v761 = vsel %vm706, %v760, %v756
        %v762 = vlaneseq
        %v763 = vshrl.u32 %v762, 7
        %v764 = vsub.s32 %v696, %v763
        %v765 = vrot.slane %v677, %v764
        %v766 = vlaneseq
        %v767 = vshrl.u32 %v766, 7
        %v768 = vsub.s32 %v701, %v767
        %v769 = vrot.slane %v678, %v768
        %v770 = vsel %vm706, %v769, %v765
        %vm771 = vcmask 1041409
        %v772 = vsel %vm771, %v716, %v707
        %vm773 = vcmask 1042434
        %v774 = vsel %vm773, %v725, %v772
        %vm775 = vcmask 1043459
        %v776 = vsel %vm775, %v734, %v774
        %vm777 = vcmask 1044484
        %v778 = vsel %vm777, %v743, %v776
        %vm779 = vcmask 1045509
        %v780 = vsel %vm779, %v752, %v778
        %vm781 = vcmask 1046534
        %v782 = vsel %vm781, %v761, %v780
        %vm783 = vcmask 1047559
        %v784 = vsel %vm783, %v770, %v782
        %vm786 = vcmask 130048
        %v787 = vsel %vm786, %v784, -inf
        %788 = vmax.xlane.f32.xlu0 %v787
        %v789 = vpop.xlane.xlu0 %788
        %v791 = vlaneseq
        %v792 = vshrl.u32 %v791, 7
        %v793 = vsub.s32 0, %v792
        %v794 = vrot.slane %v789, %v793
        %v795 = vlaneseq
        %v796 = vshrl.u32 %v795, 7
        %v797 = vsub.s32 1, %v796
        %v798 = vrot.slane %v789, %v797
        %v799 = vlaneseq
        %v800 = vshrl.u32 %v799, 7
        %v801 = vsub.s32 2, %v800
        %v802 = vrot.slane %v789, %v801
        %v803 = vlaneseq
        %v804 = vshrl.u32 %v803, 7
        %v805 = vsub.s32 3, %v804
        %v806 = vrot.slane %v789, %v805
        %v807 = vlaneseq
        %v808 = vshrl.u32 %v807, 7
        %v809 = vsub.s32 4, %v808
        %v810 = vrot.slane %v789, %v809
        %v811 = vlaneseq
        %v812 = vshrl.u32 %v811, 7
        %v813 = vsub.s32 5, %v812
        %v814 = vrot.slane %v789, %v813
        %v815 = vlaneseq
        %v816 = vshrl.u32 %v815, 7
        %v817 = vsub.s32 6, %v816
        %v818 = vrot.slane %v789, %v817
        %v819 = vlaneseq
        %v820 = vshrl.u32 %v819, 7
        %v821 = vsub.s32 7, %v820
        %v822 = vrot.slane %v789, %v821
        %v831 = vsub.f32 %v663, %v794
        %v832 = vsub.f32 %v664, %v794
        %v833 = vsub.f32 %v665, %v798
        %v834 = vsub.f32 %v666, %v798
        %v835 = vsub.f32 %v667, %v802
        %v836 = vsub.f32 %v668, %v802
        %v837 = vsub.f32 %v669, %v806
        %v838 = vsub.f32 %v670, %v806
        %v839 = vsub.f32 %v671, %v810
        %v840 = vsub.f32 %v672, %v810
        %v841 = vsub.f32 %v673, %v814
        %v842 = vsub.f32 %v674, %v814
        %v843 = vsub.f32 %v675, %v818
        %v844 = vsub.f32 %v676, %v818
        %v845 = vsub.f32 %v677, %v822
        %v846 = vsub.f32 %v678, %v822
        %v847 = vmul.f32 %v831, 1.442695
        %v848 = vpow.pop %v847
        %v849 = vmul.f32 %v832, 1.442695
        %v850 = vpow.pop %v849
        %v851 = vmul.f32 %v833, 1.442695
        %v852 = vpow.pop %v851
        %v853 = vmul.f32 %v834, 1.442695
        %v854 = vpow.pop %v853
        %v855 = vmul.f32 %v835, 1.442695
        %v856 = vpow.pop %v855
        %v857 = vmul.f32 %v836, 1.442695
        %v858 = vpow.pop %v857
        %v859 = vmul.f32 %v837, 1.442695
        %v860 = vpow.pop %v859
        %v861 = vmul.f32 %v838, 1.442695
        %v862 = vpow.pop %v861
        %v863 = vmul.f32 %v839, 1.442695
        %v864 = vpow.pop %v863
        %v865 = vmul.f32 %v840, 1.442695
        %v866 = vpow.pop %v865
        %v867 = vmul.f32 %v841, 1.442695
        %v868 = vpow.pop %v867
        %v869 = vmul.f32 %v842, 1.442695
        %v870 = vpow.pop %v869
        %v871 = vmul.f32 %v843, 1.442695
        %v872 = vpow.pop %v871
        %v873 = vmul.f32 %v844, 1.442695
        %v874 = vpow.pop %v873
        %v875 = vmul.f32 %v845, 1.442695
        %v876 = vpow.pop %v875
        %v877 = vmul.f32 %v846, 1.442695
        %v878 = vpow.pop %v877
        %895 = vset.pattern.permute.xlu0 0
        %896 = vperm.xlu0 %895, %v848
        %v897 = vpop.permute.xlu0 %896
        %898 = vset.pattern.permute.xlu0 0
        %899 = vperm.xlu0 %898, %v850
        %v900 = vpop.permute.xlu0 %899
        %901 = vset.pattern.permute.xlu0 0
        %902 = vperm.xlu0 %901, %v852
        %v903 = vpop.permute.xlu0 %902
        %904 = vset.pattern.permute.xlu0 0
        %905 = vperm.xlu0 %904, %v854
        %v906 = vpop.permute.xlu0 %905
        %907 = vset.pattern.permute.xlu0 0
        %908 = vperm.xlu0 %907, %v856
        %v909 = vpop.permute.xlu0 %908
        %910 = vset.pattern.permute.xlu0 0
        %911 = vperm.xlu0 %910, %v858
        %v912 = vpop.permute.xlu0 %911
        %913 = vset.pattern.permute.xlu0 0
        %914 = vperm.xlu0 %913, %v860
        %v915 = vpop.permute.xlu0 %914
        %916 = vset.pattern.permute.xlu0 0
        %917 = vperm.xlu0 %916, %v862
        %v918 = vpop.permute.xlu0 %917
        %919 = vset.pattern.permute.xlu0 0
        %920 = vperm.xlu0 %919, %v864
        %v921 = vpop.permute.xlu0 %920
        %922 = vset.pattern.permute.xlu0 0
        %923 = vperm.xlu0 %922, %v866
        %v924 = vpop.permute.xlu0 %923
        %925 = vset.pattern.permute.xlu0 0
        %926 = vperm.xlu0 %925, %v868
        %v927 = vpop.permute.xlu0 %926
        %928 = vset.pattern.permute.xlu0 0
        %929 = vperm.xlu0 %928, %v870
        %v930 = vpop.permute.xlu0 %929
        %931 = vset.pattern.permute.xlu0 0
        %932 = vperm.xlu0 %931, %v872
        %v933 = vpop.permute.xlu0 %932
        %934 = vset.pattern.permute.xlu0 0
        %935 = vperm.xlu0 %934, %v874
        %v936 = vpop.permute.xlu0 %935
        %937 = vset.pattern.permute.xlu0 0
        %938 = vperm.xlu0 %937, %v876
        %v939 = vpop.permute.xlu0 %938
        %940 = vset.pattern.permute.xlu0 0
        %941 = vperm.xlu0 %940, %v878
        %v942 = vpop.permute.xlu0 %941
        %v943 = vlaneseq
        %v944 = vshrl.u32 %v943, 7
        %v945 = vsub.s32 %v696, %v944
        %v946 = vrot.slane %v897, %v945
        %v947 = vlaneseq
        %v948 = vshrl.u32 %v947, 7
        %v949 = vsub.s32 %v701, %v948
        %v950 = vrot.slane %v900, %v949
        %v951 = vsel %vm706, %v950, %v946
        %v952 = vlaneseq
        %v953 = vshrl.u32 %v952, 7
        %v954 = vsub.s32 %v696, %v953
        %v955 = vrot.slane %v903, %v954
        %v956 = vlaneseq
        %v957 = vshrl.u32 %v956, 7
        %v958 = vsub.s32 %v701, %v957
        %v959 = vrot.slane %v906, %v958
        %v960 = vsel %vm706, %v959, %v955
        %v961 = vlaneseq
        %v962 = vshrl.u32 %v961, 7
        %v963 = vsub.s32 %v696, %v962
        %v964 = vrot.slane %v909, %v963
        %v965 = vlaneseq
        %v966 = vshrl.u32 %v965, 7
        %v967 = vsub.s32 %v701, %v966
        %v968 = vrot.slane %v912, %v967
        %v969 = vsel %vm706, %v968, %v964
        %v970 = vlaneseq
        %v971 = vshrl.u32 %v970, 7
        %v972 = vsub.s32 %v696, %v971
        %v973 = vrot.slane %v915, %v972
        %v974 = vlaneseq
        %v975 = vshrl.u32 %v974, 7
        %v976 = vsub.s32 %v701, %v975
        %v977 = vrot.slane %v918, %v976
        %v978 = vsel %vm706, %v977, %v973
        %v979 = vlaneseq
        %v980 = vshrl.u32 %v979, 7
        %v981 = vsub.s32 %v696, %v980
        %v982 = vrot.slane %v921, %v981
        %v983 = vlaneseq
        %v984 = vshrl.u32 %v983, 7
        %v985 = vsub.s32 %v701, %v984
        %v986 = vrot.slane %v924, %v985
        %v987 = vsel %vm706, %v986, %v982
        %v988 = vlaneseq
        %v989 = vshrl.u32 %v988, 7
        %v990 = vsub.s32 %v696, %v989
        %v991 = vrot.slane %v927, %v990
        %v992 = vlaneseq
        %v993 = vshrl.u32 %v992, 7
        %v994 = vsub.s32 %v701, %v993
        %v995 = vrot.slane %v930, %v994
        %v996 = vsel %vm706, %v995, %v991
        %v997 = vlaneseq
        %v998 = vshrl.u32 %v997, 7
        %v999 = vsub.s32 %v696, %v998
        %v1000 = vrot.slane %v933, %v999
        %v1001 = vlaneseq
        %v1002 = vshrl.u32 %v1001, 7
        %v1003 = vsub.s32 %v701, %v1002
        %v1004 = vrot.slane %v936, %v1003
        %v1005 = vsel %vm706, %v1004, %v1000
        %v1006 = vlaneseq
        %v1007 = vshrl.u32 %v1006, 7
        %v1008 = vsub.s32 %v696, %v1007
        %v1009 = vrot.slane %v939, %v1008
        %v1010 = vlaneseq
        %v1011 = vshrl.u32 %v1010, 7
        %v1012 = vsub.s32 %v701, %v1011
        %v1013 = vrot.slane %v942, %v1012
        %v1014 = vsel %vm706, %v1013, %v1009
        %v1015 = vsel %vm771, %v960, %v951
        %v1016 = vsel %vm773, %v969, %v1015
        %v1017 = vsel %vm775, %v978, %v1016
        %v1018 = vsel %vm777, %v987, %v1017
        %v1019 = vsel %vm779, %v996, %v1018
        %v1020 = vsel %vm781, %v1005, %v1019
        %v1021 = vsel %vm783, %v1014, %v1020
        %v1023 = vsel %vm786, %v1021, 0.0
        %1024 = vadd.xlane.f32.xlu0 %v1023
        %v1025 = vpop.xlane.xlu0 %1024
        %v1026 = vunpack.c.l.bf16 %v262
        %v1027 = vunpack.c.h.bf16 %v262
        %v1028 = vunpack.c.l.bf16 %v263
        %v1029 = vunpack.c.h.bf16 %v263
        %v1030 = vunpack.c.l.bf16 %v264
        %v1031 = vunpack.c.h.bf16 %v264
        %v1032 = vunpack.c.l.bf16 %v265
        %v1033 = vunpack.c.h.bf16 %v265
        %v1034 = vunpack.c.l.bf16 %v266
        %v1035 = vunpack.c.h.bf16 %v266
        %v1036 = vunpack.c.l.bf16 %v267
        %v1037 = vunpack.c.h.bf16 %v267
        %v1038 = vunpack.c.l.bf16 %v268
        %v1039 = vunpack.c.h.bf16 %v268
        %v1040 = vunpack.c.l.bf16 %v269
        %v1041 = vunpack.c.h.bf16 %v269
        %v1042 = vunpack.c.l.bf16 %v270
        %v1043 = vunpack.c.h.bf16 %v270
        %v1044 = vunpack.c.l.bf16 %v271
        %v1045 = vunpack.c.h.bf16 %v271
        %v1046 = vunpack.c.l.bf16 %v272
        %v1047 = vunpack.c.h.bf16 %v272
        %v1048 = vunpack.c.l.bf16 %v273
        %v1049 = vunpack.c.h.bf16 %v273
        %v1050 = vunpack.c.l.bf16 %v274
        %v1051 = vunpack.c.h.bf16 %v274
        %v1052 = vunpack.c.l.bf16 %v275
        %v1053 = vunpack.c.h.bf16 %v275
        %v1054 = vunpack.c.l.bf16 %v276
        %v1055 = vunpack.c.h.bf16 %v276
        %v1056 = vunpack.c.l.bf16 %v277
        %v1057 = vunpack.c.h.bf16 %v277
        %v1074 = vmul.f32 %v897, %v1026
        %v1075 = vmul.f32 %v897, %v1027
        %v1076 = vmul.f32 %v900, %v1028
        %v1077 = vmul.f32 %v900, %v1029
        %v1078 = vmul.f32 %v903, %v1030
        %v1079 = vmul.f32 %v903, %v1031
        %v1080 = vmul.f32 %v906, %v1032
        %v1081 = vmul.f32 %v906, %v1033
        %v1082 = vmul.f32 %v909, %v1034
        %v1083 = vmul.f32 %v909, %v1035
        %v1084 = vmul.f32 %v912, %v1036
        %v1085 = vmul.f32 %v912, %v1037
        %v1086 = vmul.f32 %v915, %v1038
        %v1087 = vmul.f32 %v915, %v1039
        %v1088 = vmul.f32 %v918, %v1040
        %v1089 = vmul.f32 %v918, %v1041
        %v1090 = vmul.f32 %v921, %v1042
        %v1091 = vmul.f32 %v921, %v1043
        %v1092 = vmul.f32 %v924, %v1044
        %v1093 = vmul.f32 %v924, %v1045
        %v1094 = vmul.f32 %v927, %v1046
        %v1095 = vmul.f32 %v927, %v1047
        %v1096 = vmul.f32 %v930, %v1048
        %v1097 = vmul.f32 %v930, %v1049
        %v1098 = vmul.f32 %v933, %v1050
        %v1099 = vmul.f32 %v933, %v1051
        %v1100 = vmul.f32 %v936, %v1052
        %v1101 = vmul.f32 %v936, %v1053
        %v1102 = vmul.f32 %v939, %v1054
        %v1103 = vmul.f32 %v939, %v1055
        %v1104 = vmul.f32 %v942, %v1056
        %v1105 = vmul.f32 %v942, %v1057
        %v1106 = vadd.f32 %v1074, %v1076
        %v1107 = vrot.slane %v1106, 4
        %v1108 = vadd.f32 %v1106, %v1107
        %v1109 = vrot.slane %v1108, 2
        %v1110 = vadd.f32 %v1108, %v1109
        %v1111 = vrot.slane %v1110, 1
        %v1112 = vadd.f32 %v1110, %v1111
        %v1113 = vadd.f32 %v1075, %v1077
        %v1114 = vrot.slane %v1113, 4
        %v1115 = vadd.f32 %v1113, %v1114
        %v1116 = vrot.slane %v1115, 2
        %v1117 = vadd.f32 %v1115, %v1116
        %v1118 = vrot.slane %v1117, 1
        %v1119 = vadd.f32 %v1117, %v1118
        %v1120 = vadd.f32 %v1078, %v1080
        %v1121 = vrot.slane %v1120, 4
        %v1122 = vadd.f32 %v1120, %v1121
        %v1123 = vrot.slane %v1122, 2
        %v1124 = vadd.f32 %v1122, %v1123
        %v1125 = vrot.slane %v1124, 1
        %v1126 = vadd.f32 %v1124, %v1125
        %v1127 = vadd.f32 %v1079, %v1081
        %v1128 = vrot.slane %v1127, 4
        %v1129 = vadd.f32 %v1127, %v1128
        %v1130 = vrot.slane %v1129, 2
        %v1131 = vadd.f32 %v1129, %v1130
        %v1132 = vrot.slane %v1131, 1
        %v1133 = vadd.f32 %v1131, %v1132
        %v1134 = vadd.f32 %v1082, %v1084
        %v1135 = vrot.slane %v1134, 4
        %v1136 = vadd.f32 %v1134, %v1135
        %v1137 = vrot.slane %v1136, 2
        %v1138 = vadd.f32 %v1136, %v1137
        %v1139 = vrot.slane %v1138, 1
        %v1140 = vadd.f32 %v1138, %v1139
        %v1141 = vadd.f32 %v1083, %v1085
        %v1142 = vrot.slane %v1141, 4
        %v1143 = vadd.f32 %v1141, %v1142
        %v1144 = vrot.slane %v1143, 2
        %v1145 = vadd.f32 %v1143, %v1144
        %v1146 = vrot.slane %v1145, 1
        %v1147 = vadd.f32 %v1145, %v1146
        %v1148 = vadd.f32 %v1086, %v1088
        %v1149 = vrot.slane %v1148, 4
        %v1150 = vadd.f32 %v1148, %v1149
        %v1151 = vrot.slane %v1150, 2
        %v1152 = vadd.f32 %v1150, %v1151
        %v1153 = vrot.slane %v1152, 1
        %v1154 = vadd.f32 %v1152, %v1153
        %v1155 = vadd.f32 %v1087, %v1089
        %v1156 = vrot.slane %v1155, 4
        %v1157 = vadd.f32 %v1155, %v1156
        %v1158 = vrot.slane %v1157, 2
        %v1159 = vadd.f32 %v1157, %v1158
        %v1160 = vrot.slane %v1159, 1
        %v1161 = vadd.f32 %v1159, %v1160
        %v1162 = vadd.f32 %v1090, %v1092
        %v1163 = vrot.slane %v1162, 4
        %v1164 = vadd.f32 %v1162, %v1163
        %v1165 = vrot.slane %v1164, 2
        %v1166 = vadd.f32 %v1164, %v1165
        %v1167 = vrot.slane %v1166, 1
        %v1168 = vadd.f32 %v1166, %v1167
        %v1169 = vadd.f32 %v1091, %v1093
        %v1170 = vrot.slane %v1169, 4
        %v1171 = vadd.f32 %v1169, %v1170
        %v1172 = vrot.slane %v1171, 2
        %v1173 = vadd.f32 %v1171, %v1172
        %v1174 = vrot.slane %v1173, 1
        %v1175 = vadd.f32 %v1173, %v1174
        %v1176 = vadd.f32 %v1094, %v1096
        %v1177 = vrot.slane %v1176, 4
        %v1178 = vadd.f32 %v1176, %v1177
        %v1179 = vrot.slane %v1178, 2
        %v1180 = vadd.f32 %v1178, %v1179
        %v1181 = vrot.slane %v1180, 1
        %v1182 = vadd.f32 %v1180, %v1181
        %v1183 = vadd.f32 %v1095, %v1097
        %v1184 = vrot.slane %v1183, 4
        %v1185 = vadd.f32 %v1183, %v1184
        %v1186 = vrot.slane %v1185, 2
        %v1187 = vadd.f32 %v1185, %v1186
        %v1188 = vrot.slane %v1187, 1
        %v1189 = vadd.f32 %v1187, %v1188
        %v1190 = vadd.f32 %v1098, %v1100
        %v1191 = vrot.slane %v1190, 4
        %v1192 = vadd.f32 %v1190, %v1191
        %v1193 = vrot.slane %v1192, 2
        %v1194 = vadd.f32 %v1192, %v1193
        %v1195 = vrot.slane %v1194, 1
        %v1196 = vadd.f32 %v1194, %v1195
        %v1197 = vadd.f32 %v1099, %v1101
        %v1198 = vrot.slane %v1197, 4
        %v1199 = vadd.f32 %v1197, %v1198
        %v1200 = vrot.slane %v1199, 2
        %v1201 = vadd.f32 %v1199, %v1200
        %v1202 = vrot.slane %v1201, 1
        %v1203 = vadd.f32 %v1201, %v1202
        %v1204 = vadd.f32 %v1102, %v1104
        %v1205 = vrot.slane %v1204, 4
        %v1206 = vadd.f32 %v1204, %v1205
        %v1207 = vrot.slane %v1206, 2
        %v1208 = vadd.f32 %v1206, %v1207
        %v1209 = vrot.slane %v1208, 1
        %v1210 = vadd.f32 %v1208, %v1209
        %v1211 = vadd.f32 %v1103, %v1105
        %v1212 = vrot.slane %v1211, 4
        %v1213 = vadd.f32 %v1211, %v1212
        %v1214 = vrot.slane %v1213, 2
        %v1215 = vadd.f32 %v1213, %v1214
        %v1216 = vrot.slane %v1215, 1
        %v1217 = vadd.f32 %v1215, %v1216
        %v1218 = vrcp.pop %v1025
        %v1219 = vmul.f32 1.0, %v1218
        %v1221 = vrot.slane %v1219, 1
        %v1222 = vrot.slane %v1219, 2
        %v1223 = vrot.slane %v1219, 3
        %v1224 = vrot.slane %v1219, 4
        %v1225 = vrot.slane %v1219, 5
        %v1226 = vrot.slane %v1219, 6
        %v1227 = vrot.slane %v1219, 7
        %v1236 = vmul.f32 %v1112, %v1219
        %v1237 = vmul.f32 %v1119, %v1219
        %v1238 = vmul.f32 %v1126, %v1221
        %v1239 = vmul.f32 %v1133, %v1221
        %v1240 = vmul.f32 %v1140, %v1222
        %v1241 = vmul.f32 %v1147, %v1222
        %v1242 = vmul.f32 %v1154, %v1223
        %v1243 = vmul.f32 %v1161, %v1223
        %v1244 = vmul.f32 %v1168, %v1224
        %v1245 = vmul.f32 %v1175, %v1224
        %v1246 = vmul.f32 %v1182, %v1225
        %v1247 = vmul.f32 %v1189, %v1225
        %v1248 = vmul.f32 %v1196, %v1226
        %v1249 = vmul.f32 %v1203, %v1226
        %v1250 = vmul.f32 %v1210, %v1227
        %v1251 = vmul.f32 %v1217, %v1227
        %v1268 = vrot.slane %v1238, 7
        %v1269 = vsel %vm771, %v1268, %v1236
        %v1270 = vrot.slane %v1240, 6
        %v1271 = vsel %vm773, %v1270, %v1269
        %v1272 = vrot.slane %v1242, 5
        %v1273 = vsel %vm775, %v1272, %v1271
        %v1274 = vrot.slane %v1244, 4
        %v1275 = vsel %vm777, %v1274, %v1273
        %v1276 = vrot.slane %v1246, 3
        %v1277 = vsel %vm779, %v1276, %v1275
        %v1278 = vrot.slane %v1248, 2
        %v1279 = vsel %vm781, %v1278, %v1277
        %v1280 = vrot.slane %v1250, 1
        %v1281 = vsel %vm783, %v1280, %v1279
        %v1282 = vrot.slane %v1239, 7
        %v1283 = vsel %vm771, %v1282, %v1237
        %v1284 = vrot.slane %v1241, 6
        %v1285 = vsel %vm773, %v1284, %v1283
        %v1286 = vrot.slane %v1243, 5
        %v1287 = vsel %vm775, %v1286, %v1285
        %v1288 = vrot.slane %v1245, 4
        %v1289 = vsel %vm777, %v1288, %v1287
        %v1290 = vrot.slane %v1247, 3
        %v1291 = vsel %vm779, %v1290, %v1289
        %v1292 = vrot.slane %v1249, 2
        %v1293 = vsel %vm781, %v1292, %v1291
        %v1294 = vrot.slane %v1251, 1
        %v1295 = vsel %vm783, %v1294, %v1293
        %1298 = vst [vmem:[%s259] sm:$0xff] %v1281
        %1299 = vst [vmem:[%s259 + $0x8] sm:$0xff] %v1295
        %s1300 = sand.u32 %s142, 1
        %s1301 = scalar_lea.sflag [#allocation5], %s1300
        %s1302 = sand.u32 %s142, 1
        %s1303 = smul.addr %s1302, 16
        %s1304 = scalar_lea.vmem [#allocation8], %s1303
        // Predicated region
        $region49: #{tpu_custom_call.1} parent=39 // pred_check
          %p1305 = pneg %p152
        $region50: #{tpu_custom_call.1} parent=39 // pred_check_branch
          %1307 = sbr.rel (%p1305) target = $region52
        $region51: #{tpu_custom_call.1} parent=39 // pred_region
          %s1309 = ssub.s32 256, 256
          %1310 = vsyncadd %s1301, %s1309
          %s1311 = smul.addr %s24, 2
          %s1312 = smul.addr %s1311, 128
          %s1313 = scalar_lea.hbm %s5, %s1312
          %s1315 = sshll.u32 %s1304, 4
          %s1316 = int_to_ptr.vmem [resolvable:$true] %s1315
          %1318 = dma.vmem_to_hbm [thread:$0]  %s1316, 256, %s1313, %s1301
        $region52: #{tpu_custom_call.1} parent=39 // pred_fallthru
          _
      $region40: #{tpu_custom_call.1} parent=5 // pred_fallthru
        _
      %p1319 = scmp.le.s32.totalorder 2, %s19
      // Predicated region
      $region53: #{tpu_custom_call.1} parent=5 // pred_check
        %p1320 = pneg %p1319
      $region54: #{tpu_custom_call.1} parent=5 // pred_check_branch
        %1322 = sbr.rel (%p1320) target = $region56
      $region55: #{tpu_custom_call.1} parent=5 // pred_region
        %s1323 = ssub.s32 %s19, 2
        // Predicated region
        $region57: #{tpu_custom_call.1} parent=55 // pred_check
          %p1324 = pneg %p158
        $region58: #{tpu_custom_call.1} parent=55 // pred_check_branch
          %1326 = sbr.rel (%p1324) target = $region60
        $region59: #{tpu_custom_call.1} parent=55 // pred_region
          %s1327 = sand.u32 %s143, 1
          %s1328 = scalar_lea.sflag [#allocation5], %s1327
          %s1329 = sand.u32 %s143, 1
          %s1330 = smul.addr %s1329, 16
          %s1331 = scalar_lea.vmem [#allocation8], %s1330
          %1332 = dma.done %s1328, 256
        $region60: #{tpu_custom_call.1} parent=55 // pred_fallthru
          _
      $region56: #{tpu_custom_call.1} parent=5 // pred_fallthru
        _
    $region6: #{tpu_custom_call.1} parent=1 // loop_footer
      %s23 = sadd.s32 1, %s19
    $region7: #{tpu_custom_call.1} parent=1 // loop_footer_branch
      %18 = sbr.rel target = $region3
    $region8: #{tpu_custom_call.1} parent=1 // loop_exit
      _
    %1333 = vsyncpa [#allocation4], 1
    %s1334 = scalar_lea.sflag [#allocation4], 1
    %1335 = vsyncpa %s1334, 1
    %1336 = vsyncpa [#allocation7], 1
    %1337 = vsyncpa [#allocation5], 1
    %s1338 = scalar_lea.sflag [#allocation5], 1
    %1339 = vsyncpa %s1338, 1

// kernel: tpu_custom_call.1
$region0: #{tpu_custom_call.1}
  #allocation0 [shape = 'u32[]', space=smem, size = 0x4, offset = 0x4, fixed_abs, tag = 'smem constant byte address 0x4 - core index']
  #allocation1 [shape = 'u32[144,128]{1,0:T(1,128)}', space=vmem, size = 0x12000, scoped, tag = 'internal scratch']
  #allocation2 [shape = 'f32[1,1]{1,0:T(1,128)S(6)}', space=smem, size = 0x200, scoped, tag = 'scoped memory for tpu_custom_call.1']
  %s0 = inlined_call_operand.hbm [shape: bf16[16,16,256], index: 0, kind: input, shape index: {}]
  %s1 = inlined_call_operand.hbm [shape: bf16[256,128], index: 1, kind: input, shape index: {}]
  %s2 = inlined_call_operand.vmem [shape: f32[1,128], index: 2, kind: input, shape index: {}]
  %s3 = inlined_call_operand.vmem [shape: f32[1,128], index: 3, kind: input, shape index: {}]
  %s4 = inlined_call_operand.<no memory space> [shape: f32[1,1], index: 4, kind: input, shape index: {}]
  %s5 = inlined_call_operand.hbm [shape: f32[16,256], index: 5, kind: output, shape index: {}]
  %s6 = sld [smem:[#allocation0]]
  $region61: #{tpu_custom_call.1} parent=0
    _
  %s8 = ssub.s32 1, %s6
  %s9 = scalar_select 0, %s8, %s6
  %10 = sst [smem:[#allocation2]] %s4
  $region1: #{tpu_custom_call.1} parent=0
    #allocation3 [shape = 'u8[131072]{0}', space=vmem, size = 0x20000, scoped, tag = 'input window, operand 0']
    #allocation4 [shape = 's32[2]{0}', space=sflag, size = 0x8, scoped, tag = 'scoped memory for tpu_custom_call.1']
    #allocation5 [shape = 's32[2]{0}', space=sflag, size = 0x8, scoped, tag = 'scoped memory for tpu_custom_call.1']
    #allocation6 [shape = 'u8[65536]{0}', space=vmem, size = 0x10000, scoped, tag = 'input window, operand 1, single buffered']
    #allocation7 [shape = 's32[1]{0}', space=sflag, size = 0x4, scoped, tag = 'scoped memory for tpu_custom_call.1']
    #allocation8 [shape = 'u8[16384]{0}', space=vmem, size = 0x4000, scoped, tag = 'output window, operand 0']
    %11 = vsyncpa [#allocation4], 0
    %s12 = scalar_lea.sflag [#allocation4], 1
    %13 = vsyncpa %s12, 0
    %14 = vsyncpa [#allocation7], 0
    %15 = vsyncpa [#allocation5], 0
    %s16 = scalar_lea.sflag [#allocation5], 1
    %17 = vsyncpa %s16, 0
    loop: start=0, step=1, limit=4
    $region2: #{tpu_custom_call.1} parent=1 // loop_pre_header
      _
    $region3: #{tpu_custom_call.1} parent=1 // loop_header
      %s19 = sphi 0, %s23
      %p20 = scmp.ge.s32.totalorder %s19, 4
      %s29 = sphi 0, %s31
      %s32 = sphi 0, %s29
      %s33 = sphi 0, %s32
      %s49 = sphi 0, %s33
      %s53 = sphi 0, %s53
      %s55 = sphi 0, %s53
      %s56 = sphi 0, %s55
      %s70 = sphi 0, %s56
      %s74 = sphi 0, %s74
      %s76 = sphi 0, %s74
      %s77 = sphi 0, %s76
      %s91 = sphi 0, %s77
      %s95 = sphi 0, %s95
      %s97 = sphi 0, %s95
      %s98 = sphi 0, %s97
      %s112 = sphi 0, %s98
      %s116 = sphi 0, %s116
      %s118 = sphi 0, %s116
      %s119 = sphi 0, %s118
      %s133 = sphi 0, %s119
      %s139 = sphi 0, %s141
      %s142 = sphi 0, %s139
      %s143 = sphi 0, %s142
      %s159 = sphi 0, %s143
    $region4: #{tpu_custom_call.1} parent=1 // loop_header_branch
      %22 = sbr.rel (%p20) target = $region8
    $region5: #{tpu_custom_call.1} parent=1 // loop_body
      %s24 = ssub.s32 %s19, 1
      %s25 = ssub.s32 %s19, 2
      %s26 = sadd.s32 %s19, 1
      %s27 = ssub.s32 %s19, %s26
      %p28 = scmp.eq.s32.totalorder %s27, 0
      %s30 = sadd.s32 %s29, 1
      %s31 = scalar_select %p28, %s29, %s30
      %p34 = pneg %p28
      %p35 = scmp.eq.s32.totalorder %s19, 1
      %p36 = por %p34, %p35
      %p37 = scmp.ne.s32.totalorder %s29, %s32
      %p38 = scmp.eq.s32.totalorder %s19, 0
      %p39 = por %p37, %p38
      %p40 = scmp.ne.s32.totalorder %s29, %s32
      %p41 = scmp.eq.s32.totalorder %s24, 1
      %p42 = por %p40, %p41
      %p43 = scmp.ne.s32.totalorder %s32, %s33
      %p44 = scmp.eq.s32.totalorder %s24, 0
      %p45 = por %p43, %p44
      %p46 = scmp.ne.s32.totalorder %s32, %s33
      %p47 = scmp.eq.s32.totalorder %s25, 1
      %p48 = por %p46, %p47
      %p50 = scmp.ne.s32.totalorder %s33, %s49
      %p51 = scmp.eq.s32.totalorder %s25, 0
      %p52 = por %p50, %p51
      %s54 = sadd.s32 %s53, 1
      %p57 = scmp.eq.s32.totalorder %s19, 1
      %p58 = scmp.ne.s32.totalorder %s53, %s55
      %p59 = scmp.eq.s32.totalorder %s19, 0
      %p60 = por %p58, %p59
      %p61 = scmp.ne.s32.totalorder %s53, %s55
      %p62 = scmp.eq.s32.totalorder %s24, 1
      %p63 = por %p61, %p62
      %p64 = scmp.ne.s32.totalorder %s55, %s56
      %p65 = scmp.eq.s32.totalorder %s24, 0
      %p66 = por %p64, %p65
      %p67 = scmp.ne.s32.totalorder %s55, %s56
      %p68 = scmp.eq.s32.totalorder %s25, 1
      %p69 = por %p67, %p68
      %p71 = scmp.ne.s32.totalorder %s56, %s70
      %p72 = scmp.eq.s32.totalorder %s25, 0
      %p73 = por %p71, %p72
      %s75 = sadd.s32 %s74, 1
      %p78 = scmp.eq.s32.totalorder %s19, 1
      %p79 = scmp.ne.s32.totalorder %s74, %s76
      %p80 = scmp.eq.s32.totalorder %s19, 0
      %p81 = por %p79, %p80
      %p82 = scmp.ne.s32.totalorder %s74, %s76
      %p83 = scmp.eq.s32.totalorder %s24, 1
      %p84 = por %p82, %p83
      %p85 = scmp.ne.s32.totalorder %s76, %s77
      %p86 = scmp.eq.s32.totalorder %s24, 0
      %p87 = por %p85, %p86
      %p88 = scmp.ne.s32.totalorder %s76, %s77
      %p89 = scmp.eq.s32.totalorder %s25, 1
      %p90 = por %p88, %p89
      %p92 = scmp.ne.s32.totalorder %s77, %s91
      %p93 = scmp.eq.s32.totalorder %s25, 0
      %p94 = por %p92, %p93
      %s96 = sadd.s32 %s95, 1
      %p99 = scmp.eq.s32.totalorder %s19, 1
      %p100 = scmp.ne.s32.totalorder %s95, %s97
      %p101 = scmp.eq.s32.totalorder %s19, 0
      %p102 = por %p100, %p101
      %p103 = scmp.ne.s32.totalorder %s95, %s97
      %p104 = scmp.eq.s32.totalorder %s24, 1
      %p105 = por %p103, %p104
      %p106 = scmp.ne.s32.totalorder %s97, %s98
      %p107 = scmp.eq.s32.totalorder %s24, 0
      %p108 = por %p106, %p107
      %p109 = scmp.ne.s32.totalorder %s97, %s98
      %p110 = scmp.eq.s32.totalorder %s25, 1
      %p111 = por %p109, %p110
      %p113 = scmp.ne.s32.totalorder %s98, %s112
      %p114 = scmp.eq.s32.totalorder %s25, 0
      %p115 = por %p113, %p114
      %s117 = sadd.s32 %s116, 1
      %p120 = scmp.eq.s32.totalorder %s19, 1
      %p121 = scmp.ne.s32.totalorder %s116, %s118
      %p122 = scmp.eq.s32.totalorder %s19, 0
      %p123 = por %p121, %p122
      %p124 = scmp.ne.s32.totalorder %s116, %s118
      %p125 = scmp.eq.s32.totalorder %s24, 1
      %p126 = por %p124, %p125
      %p127 = scmp.ne.s32.totalorder %s118, %s119
      %p128 = scmp.eq.s32.totalorder %s24, 0
      %p129 = por %p127, %p128
      %p130 = scmp.ne.s32.totalorder %s118, %s119
      %p131 = scmp.eq.s32.totalorder %s25, 1
      %p132 = por %p130, %p131
      %p134 = scmp.ne.s32.totalorder %s119, %s133
      %p135 = scmp.eq.s32.totalorder %s25, 0
      %p136 = por %p134, %p135
      %s137 = ssub.s32 %s19, %s26
      %p138 = scmp.eq.s32.totalorder %s137, 0
      %s140 = sadd.s32 %s139, 1
      %s141 = scalar_select %p138, %s139, %s140
      %p144 = pneg %p138
      %p145 = scmp.eq.s32.totalorder %s19, 1
      %p146 = por %p144, %p145
      %p147 = scmp.ne.s32.totalorder %s139, %s142
      %p148 = scmp.eq.s32.totalorder %s19, 0
      %p149 = por %p147, %p148
      %p150 = scmp.ne.s32.totalorder %s139, %s142
      %p151 = scmp.eq.s32.totalorder %s24, 1
      %p152 = por %p150, %p151
      %p153 = scmp.ne.s32.totalorder %s142, %s143
      %p154 = scmp.eq.s32.totalorder %s24, 0
      %p155 = por %p153, %p154
      %p156 = scmp.ne.s32.totalorder %s142, %s143
      %p157 = scmp.eq.s32.totalorder %s25, 1
      %p158 = por %p156, %p157
      %p160 = scmp.ne.s32.totalorder %s143, %s159
      %p161 = scmp.eq.s32.totalorder %s25, 0
      %p162 = por %p160, %p161
      %p163 = scmp.le.s32.totalorder 1, %s19
      %p164 = scmp.lt.s32.totalorder %s19, 3
      %p165 = pnand %p163, %p164
      %p166 = pneg %p165
      // Predicated region
      $region9: #{tpu_custom_call.1} parent=5 // pred_check
        _
      $region10: #{tpu_custom_call.1} parent=5 // pred_check_branch
        %168 = sbr.rel (%p165) target = $region12
      $region11: #{tpu_custom_call.1} parent=5 // pred_region
        %s169 = ssub.s32 %s19, 1
        // Predicated region
        $region13: #{tpu_custom_call.1} parent=11 // pred_check
          %p170 = pneg %p66
        $region14: #{tpu_custom_call.1} parent=11 // pred_check_branch
          %172 = sbr.rel (%p170) target = $region16
        $region15: #{tpu_custom_call.1} parent=11 // pred_region
          %s174 = ssub.s32 2048, 2048
          %175 = vsyncadd [#allocation7], %s174
          %s176 = sshll.u32 [#allocation6], 4
          %s177 = int_to_ptr.vmem [resolvable:$true] %s176
          %182 = dma.hbm_to_vmem [thread:$0]  %s1, 2048, %s177, [#allocation7], 64, 64, 4
        $region16: #{tpu_custom_call.1} parent=11 // pred_fallthru
          _
        // Predicated region
        $region17: #{tpu_custom_call.1} parent=11 // pred_check
          %p183 = pneg %p87
        $region18: #{tpu_custom_call.1} parent=11 // pred_check_branch
          %185 = sbr.rel (%p183) target = $region20
        $region19: #{tpu_custom_call.1} parent=11 // pred_region
          _
        $region20: #{tpu_custom_call.1} parent=11 // pred_fallthru
          _
        // Predicated region
        $region21: #{tpu_custom_call.1} parent=11 // pred_check
          %p186 = pneg %p108
        $region22: #{tpu_custom_call.1} parent=11 // pred_check_branch
          %188 = sbr.rel (%p186) target = $region24
        $region23: #{tpu_custom_call.1} parent=11 // pred_region
          _
        $region24: #{tpu_custom_call.1} parent=11 // pred_fallthru
          _
        // Predicated region
        $region25: #{tpu_custom_call.1} parent=11 // pred_check
          %p189 = pneg %p129
        $region26: #{tpu_custom_call.1} parent=11 // pred_check_branch
          %191 = sbr.rel (%p189) target = $region28
        $region27: #{tpu_custom_call.1} parent=11 // pred_region
          _
        $region28: #{tpu_custom_call.1} parent=11 // pred_fallthru
          _
      $region12: #{tpu_custom_call.1} parent=5 // pred_fallthru
        _
      %p192 = scmp.lt.s32.totalorder %s19, 2
      // Predicated region
      $region29: #{tpu_custom_call.1} parent=5 // pred_check
        %p193 = pneg %p192
      $region30: #{tpu_custom_call.1} parent=5 // pred_check_branch
        %195 = sbr.rel (%p193) target = $region32
      $region31: #{tpu_custom_call.1} parent=5 // pred_region
        // Predicated region
        $region33: #{tpu_custom_call.1} parent=31 // pred_check
          %p196 = pneg %p39
        $region34: #{tpu_custom_call.1} parent=31 // pred_check_branch
          %198 = sbr.rel (%p196) target = $region36
        $region35: #{tpu_custom_call.1} parent=31 // pred_region
          %s199 = sand.u32 %s29, 1
          %s200 = scalar_lea.sflag [#allocation4], %s199
          %s201 = sand.u32 %s29, 1
          %s202 = smul.addr %s201, 128
          %s203 = scalar_lea.vmem [#allocation3], %s202
          %s204 = smul.u32 8, %s19
          %s206 = ssub.s32 2048, 2048
          %207 = vsyncadd %s200, %s206
          %s208 = smul.addr %s204, 4
          %s209 = smul.addr %s208, 64
          %s210 = scalar_lea.hbm %s0, %s209
          %s211 = sshll.u32 %s203, 4
          %s212 = int_to_ptr.vmem [resolvable:$true] %s211
          %217 = dma.hbm_to_vmem [thread:$0]  %s210, 2048, %s212, %s200, 128, 128, 8
        $region36: #{tpu_custom_call.1} parent=31 // pred_fallthru
          _
      $region32: #{tpu_custom_call.1} parent=5 // pred_fallthru
        _
      %p218 = scmp.le.s32.totalorder 1, %s19
      %p219 = scmp.lt.s32.totalorder %s19, 3
      %p220 = pnand %p218, %p219
      %p221 = pneg %p220
      // Predicated region
      $region37: #{tpu_custom_call.1} parent=5 // pred_check
        _
      $region38: #{tpu_custom_call.1} parent=5 // pred_check_branch
        %223 = sbr.rel (%p220) target = $region40
      $region39: #{tpu_custom_call.1} parent=5 // pred_region
        %s224 = ssub.s32 %s19, 1
        %s225 = sand.u32 %s32, 1
        %s226 = scalar_lea.sflag [#allocation4], %s225
        %s227 = sand.u32 %s32, 1
        %s228 = smul.addr %s227, 128
        %s229 = scalar_lea.vmem [#allocation3], %s228
        // Predicated region
        $region41: #{tpu_custom_call.1} parent=39 // pred_check
          %p230 = pneg %p45
        $region42: #{tpu_custom_call.1} parent=39 // pred_check_branch
          %232 = sbr.rel (%p230) target = $region44
        $region43: #{tpu_custom_call.1} parent=39 // pred_region
          %233 = dma.done %s226, 2048
        $region44: #{tpu_custom_call.1} parent=39 // pred_fallthru
          _
        // Predicated region
        $region45: #{tpu_custom_call.1} parent=39 // pred_check
          %p234 = pneg %p66
        $region46: #{tpu_custom_call.1} parent=39 // pred_check_branch
          %236 = sbr.rel (%p234) target = $region48
        $region47: #{tpu_custom_call.1} parent=39 // pred_region
          %237 = dma.done [#allocation7], 2048
        $region48: #{tpu_custom_call.1} parent=39 // pred_fallthru
          _
        %s238 = sand.u32 %s32, 1
        %s239 = scalar_lea.sflag [#allocation4], %s238
        %s240 = sand.u32 %s32, 1
        %s241 = smul.addr %s240, 128
        %s242 = scalar_lea.vmem [#allocation3], %s241
        %p243 = pneg %p45
        %p244 = pneg %p42
        %p245 = pneg %p66
        %p246 = pneg %p63
        %p247 = pneg %p87
        %p248 = pneg %p84
        %p249 = pneg %p108
        %p250 = pneg %p105
        %p251 = pneg %p129
        %p252 = pneg %p126
        %p253 = pneg %p155
        %p254 = pneg %p152
        %s255 = sand.u32 %s142, 1
        %s256 = scalar_lea.sflag [#allocation5], %s255
        %s257 = sand.u32 %s142, 1
        %s258 = smul.addr %s257, 16
        %s259 = scalar_lea.vmem [#allocation8], %s258
        %s260 = smul.u32 8, %s24
        %v262 = vld [vmem:[%s229] sm:$0xff]
        %v263 = vld [vmem:[%s229 + $0x8] sm:$0xff]
        %v264 = vld [vmem:[%s229 + $0x10] sm:$0xff]
        %v265 = vld [vmem:[%s229 + $0x18] sm:$0xff]
        %v266 = vld [vmem:[%s229 + $0x20] sm:$0xff]
        %v267 = vld [vmem:[%s229 + $0x28] sm:$0xff]
        %v268 = vld [vmem:[%s229 + $0x30] sm:$0xff]
        %v269 = vld [vmem:[%s229 + $0x38] sm:$0xff]
        %v270 = vld [vmem:[%s229 + $0x40] sm:$0xff]
        %v271 = vld [vmem:[%s229 + $0x48] sm:$0xff]
        %v272 = vld [vmem:[%s229 + $0x50] sm:$0xff]
        %v273 = vld [vmem:[%s229 + $0x58] sm:$0xff]
        %v274 = vld [vmem:[%s229 + $0x60] sm:$0xff]
        %v275 = vld [vmem:[%s229 + $0x68] sm:$0xff]
        %v276 = vld [vmem:[%s229 + $0x70] sm:$0xff]
        %v277 = vld [vmem:[%s229 + $0x78] sm:$0xff]
        %v278 = vld [vmem:[#allocation6] sm:$0xf]
        %v279 = vld [vmem:[#allocation6 + $0x4] sm:$0xf]
        %v280 = vld [vmem:[#allocation6 + $0x8] sm:$0xf]
        %v281 = vld [vmem:[#allocation6 + $0xc] sm:$0xf]
        %v282 = vld [vmem:[#allocation6 + $0x10] sm:$0xf]
        %v283 = vld [vmem:[#allocation6 + $0x14] sm:$0xf]
        %v284 = vld [vmem:[#allocation6 + $0x18] sm:$0xf]
        %v285 = vld [vmem:[#allocation6 + $0x1c] sm:$0xf]
        %v286 = vld [vmem:[#allocation6 + $0x20] sm:$0xf]
        %v287 = vld [vmem:[#allocation6 + $0x24] sm:$0xf]
        %v288 = vld [vmem:[#allocation6 + $0x28] sm:$0xf]
        %v289 = vld [vmem:[#allocation6 + $0x2c] sm:$0xf]
        %v290 = vld [vmem:[#allocation6 + $0x30] sm:$0xf]
        %v291 = vld [vmem:[#allocation6 + $0x34] sm:$0xf]
        %v292 = vld [vmem:[#allocation6 + $0x38] sm:$0xf]
        %v293 = vld [vmem:[#allocation6 + $0x3c] sm:$0xf]
        %v294 = vld [vmem:[#allocation6 + $0x40] sm:$0xf]
        %v295 = vld [vmem:[#allocation6 + $0x44] sm:$0xf]
        %v296 = vld [vmem:[#allocation6 + $0x48] sm:$0xf]
        %v297 = vld [vmem:[#allocation6 + $0x4c] sm:$0xf]
        %v298 = vld [vmem:[#allocation6 + $0x50] sm:$0xf]
        %v299 = vld [vmem:[#allocation6 + $0x54] sm:$0xf]
        %v300 = vld [vmem:[#allocation6 + $0x58] sm:$0xf]
        %v301 = vld [vmem:[#allocation6 + $0x5c] sm:$0xf]
        %v302 = vld [vmem:[#allocation6 + $0x60] sm:$0xf]
        %v303 = vld [vmem:[#allocation6 + $0x64] sm:$0xf]
        %v304 = vld [vmem:[#allocation6 + $0x68] sm:$0xf]
        %v305 = vld [vmem:[#allocation6 + $0x6c] sm:$0xf]
        %v306 = vld [vmem:[#allocation6 + $0x70] sm:$0xf]
        %v307 = vld [vmem:[#allocation6 + $0x74] sm:$0xf]
        %v308 = vld [vmem:[#allocation6 + $0x78] sm:$0xf]
        %v309 = vld [vmem:[#allocation6 + $0x7c] sm:$0xf]
        %v310 = vld [vmem:[%s2] sm:$0x1]
        %v312 = vlaneseq
        %v313 = vshrl.u32 %v312, 7
        %v314 = vsub.s32 0, %v313
        %v315 = vrot.slane %v310, %v314
        %v333 = vunpack.c.l.b16 %v262
        %v334 = vunpack.c.h.b16 %v262
        %v335 = vunpack.c.l.b16 %v263
        %v336 = vunpack.c.h.b16 %v263
        %v337 = vunpack.c.l.b16 %v264
        %v338 = vunpack.c.h.b16 %v264
        %v339 = vunpack.c.l.b16 %v265
        %v340 = vunpack.c.h.b16 %v265
        %v341 = vunpack.c.l.b16 %v266
        %v342 = vunpack.c.h.b16 %v266
        %v343 = vunpack.c.l.b16 %v267
        %v344 = vunpack.c.h.b16 %v267
        %v345 = vunpack.c.l.b16 %v268
        %v346 = vunpack.c.h.b16 %v268
        %v347 = vunpack.c.l.b16 %v269
        %v348 = vunpack.c.h.b16 %v269
        %v349 = vunpack.c.l.b16 %v270
        %v350 = vunpack.c.h.b16 %v270
        %v351 = vunpack.c.l.b16 %v271
        %v352 = vunpack.c.h.b16 %v271
        %v353 = vunpack.c.l.b16 %v272
        %v354 = vunpack.c.h.b16 %v272
        %v355 = vunpack.c.l.b16 %v273
        %v356 = vunpack.c.h.b16 %v273
        %v357 = vunpack.c.l.b16 %v274
        %v358 = vunpack.c.h.b16 %v274
        %v359 = vunpack.c.l.b16 %v275
        %v360 = vunpack.c.h.b16 %v275
        %v361 = vunpack.c.l.b16 %v276
        %v362 = vunpack.c.h.b16 %v276
        %v363 = vunpack.c.l.b16 %v277
        %v364 = vunpack.c.h.b16 %v277
        %v365 = vpack.c.b16 %v335, %v333
        %v366 = vpack.c.b16 %v336, %v334
        %v367 = vpack.c.b16 %v339, %v337
        %v368 = vpack.c.b16 %v340, %v338
        %v369 = vpack.c.b16 %v343, %v341
        %v370 = vpack.c.b16 %v344, %v342
        %v371 = vpack.c.b16 %v347, %v345
        %v372 = vpack.c.b16 %v348, %v346
        %v373 = vpack.c.b16 %v351, %v349
        %v374 = vpack.c.b16 %v352, %v350
        %v375 = vpack.c.b16 %v355, %v353
        %v376 = vpack.c.b16 %v356, %v354
        %v377 = vpack.c.b16 %v359, %v357
        %v378 = vpack.c.b16 %v360, %v358
        %v379 = vpack.c.b16 %v363, %v361
        %v380 = vpack.c.b16 %v364, %v362
        %v429 = vunpack.c.l.b16 %v278
        %v430 = vunpack.c.l.b16 %v279
        %v431 = vunpack.c.l.b16 %v280
        %v432 = vunpack.c.l.b16 %v281
        %v433 = vunpack.c.l.b16 %v282
        %v434 = vunpack.c.l.b16 %v283
        %v435 = vunpack.c.l.b16 %v284
        %v436 = vunpack.c.l.b16 %v285
        %v437 = vunpack.c.l.b16 %v286
        %v438 = vunpack.c.l.b16 %v287
        %v439 = vunpack.c.l.b16 %v288
        %v440 = vunpack.c.l.b16 %v289
        %v441 = vunpack.c.l.b16 %v290
        %v442 = vunpack.c.l.b16 %v291
        %v443 = vunpack.c.l.b16 %v292
        %v444 = vunpack.c.l.b16 %v293
        %v445 = vunpack.c.l.b16 %v294
        %v446 = vunpack.c.l.b16 %v295
        %v447 = vunpack.c.l.b16 %v296
        %v448 = vunpack.c.l.b16 %v297
        %v449 = vunpack.c.l.b16 %v298
        %v450 = vunpack.c.l.b16 %v299
        %v451 = vunpack.c.l.b16 %v300
        %v452 = vunpack.c.l.b16 %v301
        %v453 = vunpack.c.l.b16 %v302
        %v454 = vunpack.c.l.b16 %v303
        %v455 = vunpack.c.l.b16 %v304
        %v456 = vunpack.c.l.b16 %v305
        %v457 = vunpack.c.l.b16 %v306
        %v458 = vunpack.c.l.b16 %v307
        %v459 = vunpack.c.l.b16 %v308
        %v460 = vunpack.c.l.b16 %v309
        %v461 = vpack.c.b16 %v430, %v429
        %v462 = vpack.c.b16 %v432, %v431
        %v463 = vpack.c.b16 %v434, %v433
        %v464 = vpack.c.b16 %v436, %v435
        %v465 = vpack.c.b16 %v438, %v437
        %v466 = vpack.c.b16 %v440, %v439
        %v467 = vpack.c.b16 %v442, %v441
        %v468 = vpack.c.b16 %v444, %v443
        %v469 = vpack.c.b16 %v446, %v445
        %v470 = vpack.c.b16 %v448, %v447
        %v471 = vpack.c.b16 %v450, %v449
        %v472 = vpack.c.b16 %v452, %v451
        %v473 = vpack.c.b16 %v454, %v453
        %v474 = vpack.c.b16 %v456, %v455
        %v475 = vpack.c.b16 %v458, %v457
        %v476 = vpack.c.b16 %v460, %v459
        %493 = vmatprep.subr.bf16.mxu0 0
        %494 = vmatpush1.bf16.msra.mxu0 %v461
        %495 = vmatprep.subr.bf16.mxu0 0
        %496 = vmatpush1.bf16.msra.mxu0 %v462
        %497 = vmatprep.subr.bf16.mxu0 0
        %498 = vmatpush1.bf16.msra.mxu0 %v463
        %499 = vmatprep.subr.bf16.mxu0 0
        %500 = vmatpush1.bf16.msra.mxu0 %v464
        %501 = vmatprep.subr.bf16.mxu0 0
        %502 = vmatpush1.bf16.msra.mxu0 %v465
        %503 = vmatprep.subr.bf16.mxu0 0
        %504 = vmatpush1.bf16.msra.mxu0 %v466
        %505 = vmatprep.subr.bf16.mxu0 0
        %506 = vmatpush1.bf16.msra.mxu0 %v467
        %507 = vmatprep.subr.bf16.mxu0 0
        %508 = vmatpush1.bf16.msra.mxu0 %v468
        %509 = vmatprep.subr.bf16.mxu0 0
        %510 = vmatpush1.bf16.msra.mxu0 %v469
        %511 = vmatprep.subr.bf16.mxu0 0
        %512 = vmatpush1.bf16.msra.mxu0 %v470
        %513 = vmatprep.subr.bf16.mxu0 0
        %514 = vmatpush1.bf16.msra.mxu0 %v471
        %515 = vmatprep.subr.bf16.mxu0 0
        %516 = vmatpush1.bf16.msra.mxu0 %v472
        %517 = vmatprep.subr.bf16.mxu0 0
        %518 = vmatpush1.bf16.msra.mxu0 %v473
        %519 = vmatprep.subr.bf16.mxu0 0
        %520 = vmatpush1.bf16.msra.mxu0 %v474
        %521 = vmatprep.subr.bf16.mxu0 0
        %522 = vmatpush1.bf16.msra.mxu0 %v475
        %523 = vmatprep.subr.bf16.mxu0 0
        %524 = vmatpush1.bf16.msra.mxu0 %v476
        %525 = vmatprep.mubr.bf16.mxu0 %v366
        %526 = vmatmul.mubr.bf16.gmra.mrb[0].mxu0 %v365
        %v527 = vpop.f32.mrb[0].mxu0
        %v528 = vadd.f32 %v315, %v527
        %v529 = vpop.f32.mrb[0].mxu0
        %v530 = vpop.f32.mrb[0].mxu0
        %v531 = vadd.f32 %v315, %v530
        %v532 = vpop.f32.mrb[0].mxu0
        %533 = vmatprep.mubr.bf16.mxu0 %v368
        %534 = vmatmul.mubr.bf16.gmra.mrb[0].mxu0 %v367
        %v535 = vpop.f32.mrb[0].mxu0
        %v536 = vadd.f32 %v315, %v535
        %v537 = vpop.f32.mrb[0].mxu0
        %v538 = vpop.f32.mrb[0].mxu0
        %v539 = vadd.f32 %v315, %v538
        %v540 = vpop.f32.mrb[0].mxu0
        %541 = vmatprep.mubr.bf16.mxu0 %v370
        %542 = vmatmul.mubr.bf16.gmra.mrb[0].mxu0 %v369
        %v543 = vpop.f32.mrb[0].mxu0
        %v544 = vadd.f32 %v315, %v543
        %v545 = vpop.f32.mrb[0].mxu0
        %v546 = vpop.f32.mrb[0].mxu0
        %v547 = vadd.f32 %v315, %v546
        %v548 = vpop.f32.mrb[0].mxu0
        %549 = vmatprep.mubr.bf16.mxu0 %v372
        %550 = vmatmul.mubr.bf16.gmra.mrb[0].mxu0 %v371
        %v551 = vpop.f32.mrb[0].mxu0
        %v552 = vadd.f32 %v315, %v551
        %v553 = vpop.f32.mrb[0].mxu0
        %v554 = vpop.f32.mrb[0].mxu0
        %v555 = vadd.f32 %v315, %v554
        %v556 = vpop.f32.mrb[0].mxu0
        %557 = vmatprep.mubr.bf16.mxu0 %v374
        %558 = vmatmul.mubr.bf16.gmra.mrb[0].mxu0 %v373
        %v559 = vpop.f32.mrb[0].mxu0
        %v560 = vadd.f32 %v315, %v559
        %v561 = vpop.f32.mrb[0].mxu0
        %v562 = vpop.f32.mrb[0].mxu0
        %v563 = vadd.f32 %v315, %v562
        %v564 = vpop.f32.mrb[0].mxu0
        %565 = vmatprep.mubr.bf16.mxu0 %v376
        %566 = vmatmul.mubr.bf16.gmra.mrb[0].mxu0 %v375
        %v567 = vpop.f32.mrb[0].mxu0
        %v568 = vadd.f32 %v315, %v567
        %v569 = vpop.f32.mrb[0].mxu0
        %v570 = vpop.f32.mrb[0].mxu0
        %v571 = vadd.f32 %v315, %v570
        %v572 = vpop.f32.mrb[0].mxu0
        %573 = vmatprep.mubr.bf16.mxu0 %v378
        %574 = vmatmul.mubr.bf16.gmra.mrb[0].mxu0 %v377
        %v575 = vpop.f32.mrb[0].mxu0
        %v576 = vadd.f32 %v315, %v575
        %v577 = vpop.f32.mrb[0].mxu0
        %v578 = vpop.f32.mrb[0].mxu0
        %v579 = vadd.f32 %v315, %v578
        %v580 = vpop.f32.mrb[0].mxu0
        %581 = vmatprep.mubr.bf16.mxu0 %v380
        %582 = vmatmul.mubr.bf16.gmra.mrb[0].mxu0 %v379
        %v583 = vpop.f32.mrb[0].mxu0
        %v584 = vadd.f32 %v315, %v583
        %v585 = vpop.f32.mrb[0].mxu0
        %v586 = vpop.f32.mrb[0].mxu0
        %v587 = vadd.f32 %v315, %v586
        %v588 = vpop.f32.mrb[0].mxu0
        %589 = vdwg.mxu0
        %v590 = vtanh.pop %v528
        %v591 = vtanh.pop %v531
        %v592 = vtanh.pop %v536
        %v593 = vtanh.pop %v539
        %v594 = vtanh.pop %v544
        %v595 = vtanh.pop %v547
        %v596 = vtanh.pop %v552
        %v597 = vtanh.pop %v555
        %v598 = vtanh.pop %v560
        %v599 = vtanh.pop %v563
        %v600 = vtanh.pop %v568
        %v601 = vtanh.pop %v571
        %v602 = vtanh.pop %v576
        %v603 = vtanh.pop %v579
        %v604 = vtanh.pop %v584
        %v605 = vtanh.pop %v587
        %v606 = vld [vmem:[%s3] sm:$0x1]
        %v608 = vlaneseq
        %v609 = vshrl.u32 %v608, 7
        %v610 = vsub.s32 0, %v609
        %v611 = vrot.slane %v606, %v610
        %v613 = vmul.f32 %v590, %v611
        %v614 = vmul.f32 %v591, %v611
        %v615 = vmul.f32 %v592, %v611
        %v616 = vmul.f32 %v593, %v611
        %v617 = vmul.f32 %v594, %v611
        %v618 = vmul.f32 %v595, %v611
        %v619 = vmul.f32 %v596, %v611
        %v620 = vmul.f32 %v597, %v611
        %v621 = vmul.f32 %v598, %v611
        %v622 = vmul.f32 %v599, %v611
        %v623 = vmul.f32 %v600, %v611
        %v624 = vmul.f32 %v601, %v611
        %v625 = vmul.f32 %v602, %v611
        %v626 = vmul.f32 %v603, %v611
        %v627 = vmul.f32 %v604, %v611
        %v628 = vmul.f32 %v605, %v611
        %629 = vadd.xlane.f32.xlu0 %v613
        %v630 = vpop.xlane.xlu0 %629
        %631 = vadd.xlane.f32.xlu0 %v614
        %v632 = vpop.xlane.xlu0 %631
        %633 = vadd.xlane.f32.xlu0 %v615
        %v634 = vpop.xlane.xlu0 %633
        %635 = vadd.xlane.f32.xlu0 %v616
        %v636 = vpop.xlane.xlu0 %635
        %637 = vadd.xlane.f32.xlu0 %v617
        %v638 = vpop.xlane.xlu0 %637
        %639 = vadd.xlane.f32.xlu0 %v618
        %v640 = vpop.xlane.xlu0 %639
        %641 = vadd.xlane.f32.xlu0 %v619
        %v642 = vpop.xlane.xlu0 %641
        %643 = vadd.xlane.f32.xlu0 %v620
        %v644 = vpop.xlane.xlu0 %643
        %645 = vadd.xlane.f32.xlu0 %v621
        %v646 = vpop.xlane.xlu0 %645
        %647 = vadd.xlane.f32.xlu0 %v622
        %v648 = vpop.xlane.xlu0 %647
        %649 = vadd.xlane.f32.xlu0 %v623
        %v650 = vpop.xlane.xlu0 %649
        %651 = vadd.xlane.f32.xlu0 %v624
        %v652 = vpop.xlane.xlu0 %651
        %653 = vadd.xlane.f32.xlu0 %v625
        %v654 = vpop.xlane.xlu0 %653
        %655 = vadd.xlane.f32.xlu0 %v626
        %v656 = vpop.xlane.xlu0 %655
        %657 = vadd.xlane.f32.xlu0 %v627
        %v658 = vpop.xlane.xlu0 %657
        %659 = vadd.xlane.f32.xlu0 %v628
        %v660 = vpop.xlane.xlu0 %659
        %s661 = sld [smem:[#allocation2]]
        %v662 = vstv %s661
        %v663 = vadd.f32 %v630, %v662
        %v664 = vadd.f32 %v632, %v662
        %v665 = vadd.f32 %v634, %v662
        %v666 = vadd.f32 %v636, %v662
        %v667 = vadd.f32 %v638, %v662
        %v668 = vadd.f32 %v640, %v662
        %v669 = vadd.f32 %v642, %v662
        %v670 = vadd.f32 %v644, %v662
        %v671 = vadd.f32 %v646, %v662
        %v672 = vadd.f32 %v648, %v662
        %v673 = vadd.f32 %v650, %v662
        %v674 = vadd.f32 %v652, %v662
        %v675 = vadd.f32 %v654, %v662
        %v676 = vadd.f32 %v656, %v662
        %v677 = vadd.f32 %v658, %v662
        %v678 = vadd.f32 %v660, %v662
        %v695 = vlaneseq
        %v696 = vand.u32 %v695, 127
        %v697 = vlaneseq
        %v698 = vshrl.u32 %v697, 7
        %v699 = vsub.s32 %v696, %v698
        %v700 = vrot.slane %v663, %v699
        %v701 = vadd.s32 %v696, 4294967288
        %v702 = vlaneseq
        %v703 = vshrl.u32 %v702, 7
        %v704 = vsub.s32 %v701, %v703
        %v705 = vrot.slane %v664, %v704
        %vm706 = vcmask 130112
        %v707 = vsel %vm706, %v705, %v700
        %v708 = vlaneseq
        %v709 = vshrl.u32 %v708, 7
        %v710 = vsub.s32 %v696, %v709
        %v711 = vrot.slane %v665, %v710
        %v712 = vlaneseq
        %v713 = vshrl.u32 %v712, 7
        %v714 = vsub.s32 %v701, %v713
        %v715 = vrot.slane %v666, %v714
        %v716 = vsel %vm706, %v715, %v711
        %v717 = vlaneseq
        %v718 = vshrl.u32 %v717, 7
        %v719 = vsub.s32 %v696, %v718
        %v720 = vrot.slane %v667, %v719
        %v721 = vlaneseq
        %v722 = vshrl.u32 %v721, 7
        %v723 = vsub.s32 %v701, %v722
        %v724 = vrot.slane %v668, %v723
        %v725 = vsel %vm706, %v724, %v720
        %v726 = vlaneseq
        %v727 = vshrl.u32 %v726, 7
        %v728 = vsub.s32 %v696, %v727
        %v729 = vrot.slane %v669, %v728
        %v730 = vlaneseq
        %v731 = vshrl.u32 %v730, 7
        %v732 = vsub.s32 %v701, %v731
        %v733 = vrot.slane %v670, %v732
        %v734 = vsel %vm706, %v733, %v729
        %v735 = vlaneseq
        %v736 = vshrl.u32 %v735, 7
        %v737 = vsub.s32 %v696, %v736
        %v738 = vrot.slane %v671, %v737
        %v739 = vlaneseq
        %v740 = vshrl.u32 %v739, 7
        %v741 = vsub.s32 %v701, %v740
        %v742 = vrot.slane %v672, %v741
        %v743 = vsel %vm706, %v742, %v738
        %v744 = vlaneseq
        %v745 = vshrl.u32 %v744, 7
        %v746 = vsub.s32 %v696, %v745
        %v747 = vrot.slane %v673, %v746
        %v748 = vlaneseq
        %v749 = vshrl.u32 %v748, 7
        %v750 = vsub.s32 %v701, %v749
        %v751 = vrot.slane %v674, %v750
        %v752 = vsel %vm706, %v751, %v747
        %v753 = vlaneseq
        %v754 = vshrl.u32 %v753, 7
        %v755 = vsub.s32 %v696, %v754
        %v756 = vrot.slane %v675, %v755
        %v757 = vlaneseq
        %v758 = vshrl.u32 %v757, 7
        %v759 = vsub.s32 %v701, %v758
        %v760 = vrot.slane %v676, %v759
        %v761 = vsel %vm706, %v760, %v756
        %v762 = vlaneseq
        %v763 = vshrl.u32 %v762, 7
        %v764 = vsub.s32 %v696, %v763
        %v765 = vrot.slane %v677, %v764
        %v766 = vlaneseq
        %v767 = vshrl.u32 %v766, 7
        %v768 = vsub.s32 %v701, %v767
        %v769 = vrot.slane %v678, %v768
        %v770 = vsel %vm706, %v769, %v765
        %vm771 = vcmask 1041409
        %v772 = vsel %vm771, %v716, %v707
        %vm773 = vcmask 1042434
        %v774 = vsel %vm773, %v725, %v772
        %vm775 = vcmask 1043459
        %v776 = vsel %vm775, %v734, %v774
        %vm777 = vcmask 1044484
        %v778 = vsel %vm777, %v743, %v776
        %vm779 = vcmask 1045509
        %v780 = vsel %vm779, %v752, %v778
        %vm781 = vcmask 1046534
        %v782 = vsel %vm781, %v761, %v780
        %vm783 = vcmask 1047559
        %v784 = vsel %vm783, %v770, %v782
        %vm786 = vcmask 130048
        %v787 = vsel %vm786, %v784, -inf
        %788 = vmax.xlane.f32.xlu0 %v787
        %v789 = vpop.xlane.xlu0 %788
        %v791 = vlaneseq
        %v792 = vshrl.u32 %v791, 7
        %v793 = vsub.s32 0, %v792
        %v794 = vrot.slane %v789, %v793
        %v795 = vlaneseq
        %v796 = vshrl.u32 %v795, 7
        %v797 = vsub.s32 1, %v796
        %v798 = vrot.slane %v789, %v797
        %v799 = vlaneseq
        %v800 = vshrl.u32 %v799, 7
        %v801 = vsub.s32 2, %v800
        %v802 = vrot.slane %v789, %v801
        %v803 = vlaneseq
        %v804 = vshrl.u32 %v803, 7
        %v805 = vsub.s32 3, %v804
        %v806 = vrot.slane %v789, %v805
        %v807 = vlaneseq
        %v808 = vshrl.u32 %v807, 7
        %v809 = vsub.s32 4, %v808
        %v810 = vrot.slane %v789, %v809
        %v811 = vlaneseq
        %v812 = vshrl.u32 %v811, 7
        %v813 = vsub.s32 5, %v812
        %v814 = vrot.slane %v789, %v813
        %v815 = vlaneseq
        %v816 = vshrl.u32 %v815, 7
        %v817 = vsub.s32 6, %v816
        %v818 = vrot.slane %v789, %v817
        %v819 = vlaneseq
        %v820 = vshrl.u32 %v819, 7
        %v821 = vsub.s32 7, %v820
        %v822 = vrot.slane %v789, %v821
        %v831 = vsub.f32 %v663, %v794
        %v832 = vsub.f32 %v664, %v794
        %v833 = vsub.f32 %v665, %v798
        %v834 = vsub.f32 %v666, %v798
        %v835 = vsub.f32 %v667, %v802
        %v836 = vsub.f32 %v668, %v802
        %v837 = vsub.f32 %v669, %v806
        %v838 = vsub.f32 %v670, %v806
        %v839 = vsub.f32 %v671, %v810
        %v840 = vsub.f32 %v672, %v810
        %v841 = vsub.f32 %v673, %v814
        %v842 = vsub.f32 %v674, %v814
        %v843 = vsub.f32 %v675, %v818
        %v844 = vsub.f32 %v676, %v818
        %v845 = vsub.f32 %v677, %v822
        %v846 = vsub.f32 %v678, %v822
        %v847 = vmul.f32 %v831, 1.442695
        %v848 = vpow.pop %v847
        %v849 = vmul.f32 %v832, 1.442695
        %v850 = vpow.pop %v849
        %v851 = vmul.f32 %v833, 1.442695
        %v852 = vpow.pop %v851
        %v853 = vmul.f32 %v834, 1.442695
        %v854 = vpow.pop %v853
        %v855 = vmul.f32 %v835, 1.442695
        %v856 = vpow.pop %v855
        %v857 = vmul.f32 %v836, 1.442695
        %v858 = vpow.pop %v857
        %v859 = vmul.f32 %v837, 1.442695
        %v860 = vpow.pop %v859
        %v861 = vmul.f32 %v838, 1.442695
        %v862 = vpow.pop %v861
        %v863 = vmul.f32 %v839, 1.442695
        %v864 = vpow.pop %v863
        %v865 = vmul.f32 %v840, 1.442695
        %v866 = vpow.pop %v865
        %v867 = vmul.f32 %v841, 1.442695
        %v868 = vpow.pop %v867
        %v869 = vmul.f32 %v842, 1.442695
        %v870 = vpow.pop %v869
        %v871 = vmul.f32 %v843, 1.442695
        %v872 = vpow.pop %v871
        %v873 = vmul.f32 %v844, 1.442695
        %v874 = vpow.pop %v873
        %v875 = vmul.f32 %v845, 1.442695
        %v876 = vpow.pop %v875
        %v877 = vmul.f32 %v846, 1.442695
        %v878 = vpow.pop %v877
        %895 = vset.pattern.permute.xlu0 0
        %896 = vperm.xlu0 %895, %v848
        %v897 = vpop.permute.xlu0 %896
        %898 = vset.pattern.permute.xlu0 0
        %899 = vperm.xlu0 %898, %v850
        %v900 = vpop.permute.xlu0 %899
        %901 = vset.pattern.permute.xlu0 0
        %902 = vperm.xlu0 %901, %v852
        %v903 = vpop.permute.xlu0 %902
        %904 = vset.pattern.permute.xlu0 0
        %905 = vperm.xlu0 %904, %v854
        %v906 = vpop.permute.xlu0 %905
        %907 = vset.pattern.permute.xlu0 0
        %908 = vperm.xlu0 %907, %v856
        %v909 = vpop.permute.xlu0 %908
        %910 = vset.pattern.permute.xlu0 0
        %911 = vperm.xlu0 %910, %v858
        %v912 = vpop.permute.xlu0 %911
        %913 = vset.pattern.permute.xlu0 0
        %914 = vperm.xlu0 %913, %v860
        %v915 = vpop.permute.xlu0 %914
        %916 = vset.pattern.permute.xlu0 0
        %917 = vperm.xlu0 %916, %v862
        %v918 = vpop.permute.xlu0 %917
        %919 = vset.pattern.permute.xlu0 0
        %920 = vperm.xlu0 %919, %v864
        %v921 = vpop.permute.xlu0 %920
        %922 = vset.pattern.permute.xlu0 0
        %923 = vperm.xlu0 %922, %v866
        %v924 = vpop.permute.xlu0 %923
        %925 = vset.pattern.permute.xlu0 0
        %926 = vperm.xlu0 %925, %v868
        %v927 = vpop.permute.xlu0 %926
        %928 = vset.pattern.permute.xlu0 0
        %929 = vperm.xlu0 %928, %v870
        %v930 = vpop.permute.xlu0 %929
        %931 = vset.pattern.permute.xlu0 0
        %932 = vperm.xlu0 %931, %v872
        %v933 = vpop.permute.xlu0 %932
        %934 = vset.pattern.permute.xlu0 0
        %935 = vperm.xlu0 %934, %v874
        %v936 = vpop.permute.xlu0 %935
        %937 = vset.pattern.permute.xlu0 0
        %938 = vperm.xlu0 %937, %v876
        %v939 = vpop.permute.xlu0 %938
        %940 = vset.pattern.permute.xlu0 0
        %941 = vperm.xlu0 %940, %v878
        %v942 = vpop.permute.xlu0 %941
        %v943 = vlaneseq
        %v944 = vshrl.u32 %v943, 7
        %v945 = vsub.s32 %v696, %v944
        %v946 = vrot.slane %v897, %v945
        %v947 = vlaneseq
        %v948 = vshrl.u32 %v947, 7
        %v949 = vsub.s32 %v701, %v948
        %v950 = vrot.slane %v900, %v949
        %v951 = vsel %vm706, %v950, %v946
        %v952 = vlaneseq
        %v953 = vshrl.u32 %v952, 7
        %v954 = vsub.s32 %v696, %v953
        %v955 = vrot.slane %v903, %v954
        %v956 = vlaneseq
        %v957 = vshrl.u32 %v956, 7
        %v958 = vsub.s32 %v701, %v957
        %v959 = vrot.slane %v906, %v958
        %v960 = vsel %vm706, %v959, %v955
        %v961 = vlaneseq
        %v962 = vshrl.u32 %v961, 7
        %v963 = vsub.s32 %v696, %v962
        %v964 = vrot.slane %v909, %v963
        %v965 = vlaneseq
        %v966 = vshrl.u32 %v965, 7
        %v967 = vsub.s32 %v701, %v966
        %v968 = vrot.slane %v912, %v967
        %v969 = vsel %vm706, %v968, %v964
        %v970 = vlaneseq
        %v971 = vshrl.u32 %v970, 7
        %v972 = vsub.s32 %v696, %v971
        %v973 = vrot.slane %v915, %v972
        %v974 = vlaneseq
        %v975 = vshrl.u32 %v974, 7
        %v976 = vsub.s32 %v701, %v975
        %v977 = vrot.slane %v918, %v976
        %v978 = vsel %vm706, %v977, %v973
        %v979 = vlaneseq
        %v980 = vshrl.u32 %v979, 7
        %v981 = vsub.s32 %v696, %v980
        %v982 = vrot.slane %v921, %v981
        %v983 = vlaneseq
        %v984 = vshrl.u32 %v983, 7
        %v985 = vsub.s32 %v701, %v984
        %v986 = vrot.slane %v924, %v985
        %v987 = vsel %vm706, %v986, %v982
        %v988 = vlaneseq
        %v989 = vshrl.u32 %v988, 7
        %v990 = vsub.s32 %v696, %v989
        %v991 = vrot.slane %v927, %v990
        %v992 = vlaneseq
        %v993 = vshrl.u32 %v992, 7
        %v994 = vsub.s32 %v701, %v993
        %v995 = vrot.slane %v930, %v994
        %v996 = vsel %vm706, %v995, %v991
        %v997 = vlaneseq
        %v998 = vshrl.u32 %v997, 7
        %v999 = vsub.s32 %v696, %v998
        %v1000 = vrot.slane %v933, %v999
        %v1001 = vlaneseq
        %v1002 = vshrl.u32 %v1001, 7
        %v1003 = vsub.s32 %v701, %v1002
        %v1004 = vrot.slane %v936, %v1003
        %v1005 = vsel %vm706, %v1004, %v1000
        %v1006 = vlaneseq
        %v1007 = vshrl.u32 %v1006, 7
        %v1008 = vsub.s32 %v696, %v1007
        %v1009 = vrot.slane %v939, %v1008
        %v1010 = vlaneseq
        %v1011 = vshrl.u32 %v1010, 7
        %v1012 = vsub.s32 %v701, %v1011
        %v1013 = vrot.slane %v942, %v1012
        %v1014 = vsel %vm706, %v1013, %v1009
        %v1015 = vsel %vm771, %v960, %v951
        %v1016 = vsel %vm773, %v969, %v1015
        %v1017 = vsel %vm775, %v978, %v1016
        %v1018 = vsel %vm777, %v987, %v1017
        %v1019 = vsel %vm779, %v996, %v1018
        %v1020 = vsel %vm781, %v1005, %v1019
        %v1021 = vsel %vm783, %v1014, %v1020
        %v1023 = vsel %vm786, %v1021, 0.0
        %1024 = vadd.xlane.f32.xlu0 %v1023
        %v1025 = vpop.xlane.xlu0 %1024
        %v1026 = vunpack.c.l.bf16 %v262
        %v1027 = vunpack.c.h.bf16 %v262
        %v1028 = vunpack.c.l.bf16 %v263
        %v1029 = vunpack.c.h.bf16 %v263
        %v1030 = vunpack.c.l.bf16 %v264
        %v1031 = vunpack.c.h.bf16 %v264
        %v1032 = vunpack.c.l.bf16 %v265
        %v1033 = vunpack.c.h.bf16 %v265
        %v1034 = vunpack.c.l.bf16 %v266
        %v1035 = vunpack.c.h.bf16 %v266
        %v1036 = vunpack.c.l.bf16 %v267
        %v1037 = vunpack.c.h.bf16 %v267
        %v1038 = vunpack.c.l.bf16 %v268
        %v1039 = vunpack.c.h.bf16 %v268
        %v1040 = vunpack.c.l.bf16 %v269
        %v1041 = vunpack.c.h.bf16 %v269
        %v1042 = vunpack.c.l.bf16 %v270
        %v1043 = vunpack.c.h.bf16 %v270
        %v1044 = vunpack.c.l.bf16 %v271
        %v1045 = vunpack.c.h.bf16 %v271
        %v1046 = vunpack.c.l.bf16 %v272
        %v1047 = vunpack.c.h.bf16 %v272
        %v1048 = vunpack.c.l.bf16 %v273
        %v1049 = vunpack.c.h.bf16 %v273
        %v1050 = vunpack.c.l.bf16 %v274
        %v1051 = vunpack.c.h.bf16 %v274
        %v1052 = vunpack.c.l.bf16 %v275
        %v1053 = vunpack.c.h.bf16 %v275
        %v1054 = vunpack.c.l.bf16 %v276
        %v1055 = vunpack.c.h.bf16 %v276
        %v1056 = vunpack.c.l.bf16 %v277
        %v1057 = vunpack.c.h.bf16 %v277
        %v1074 = vmul.f32 %v897, %v1026
        %v1075 = vmul.f32 %v897, %v1027
        %v1076 = vmul.f32 %v900, %v1028
        %v1077 = vmul.f32 %v900, %v1029
        %v1078 = vmul.f32 %v903, %v1030
        %v1079 = vmul.f32 %v903, %v1031
        %v1080 = vmul.f32 %v906, %v1032
        %v1081 = vmul.f32 %v906, %v1033
        %v1082 = vmul.f32 %v909, %v1034
        %v1083 = vmul.f32 %v909, %v1035
        %v1084 = vmul.f32 %v912, %v1036
        %v1085 = vmul.f32 %v912, %v1037
        %v1086 = vmul.f32 %v915, %v1038
        %v1087 = vmul.f32 %v915, %v1039
        %v1088 = vmul.f32 %v918, %v1040
        %v1089 = vmul.f32 %v918, %v1041
        %v1090 = vmul.f32 %v921, %v1042
        %v1091 = vmul.f32 %v921, %v1043
        %v1092 = vmul.f32 %v924, %v1044
        %v1093 = vmul.f32 %v924, %v1045
        %v1094 = vmul.f32 %v927, %v1046
        %v1095 = vmul.f32 %v927, %v1047
        %v1096 = vmul.f32 %v930, %v1048
        %v1097 = vmul.f32 %v930, %v1049
        %v1098 = vmul.f32 %v933, %v1050
        %v1099 = vmul.f32 %v933, %v1051
        %v1100 = vmul.f32 %v936, %v1052
        %v1101 = vmul.f32 %v936, %v1053
        %v1102 = vmul.f32 %v939, %v1054
        %v1103 = vmul.f32 %v939, %v1055
        %v1104 = vmul.f32 %v942, %v1056
        %v1105 = vmul.f32 %v942, %v1057
        %v1106 = vadd.f32 %v1074, %v1076
        %v1107 = vrot.slane %v1106, 4
        %v1108 = vadd.f32 %v1106, %v1107
        %v1109 = vrot.slane %v1108, 2
        %v1110 = vadd.f32 %v1108, %v1109
        %v1111 = vrot.slane %v1110, 1
        %v1112 = vadd.f32 %v1110, %v1111
        %v1113 = vadd.f32 %v1075, %v1077
        %v1114 = vrot.slane %v1113, 4
        %v1115 = vadd.f32 %v1113, %v1114
        %v1116 = vrot.slane %v1115, 2
        %v1117 = vadd.f32 %v1115, %v1116
        %v1118 = vrot.slane %v1117, 1
        %v1119 = vadd.f32 %v1117, %v1118
        %v1120 = vadd.f32 %v1078, %v1080
        %v1121 = vrot.slane %v1120, 4
        %v1122 = vadd.f32 %v1120, %v1121
        %v1123 = vrot.slane %v1122, 2
        %v1124 = vadd.f32 %v1122, %v1123
        %v1125 = vrot.slane %v1124, 1
        %v1126 = vadd.f32 %v1124, %v1125
        %v1127 = vadd.f32 %v1079, %v1081
        %v1128 = vrot.slane %v1127, 4
        %v1129 = vadd.f32 %v1127, %v1128
        %v1130 = vrot.slane %v1129, 2
        %v1131 = vadd.f32 %v1129, %v1130
        %v1132 = vrot.slane %v1131, 1
        %v1133 = vadd.f32 %v1131, %v1132
        %v1134 = vadd.f32 %v1082, %v1084
        %v1135 = vrot.slane %v1134, 4
        %v1136 = vadd.f32 %v1134, %v1135
        %v1137 = vrot.slane %v1136, 2
        %v1138 = vadd.f32 %v1136, %v1137
        %v1139 = vrot.slane %v1138, 1
        %v1140 = vadd.f32 %v1138, %v1139
        %v1141 = vadd.f32 %v1083, %v1085
        %v1142 = vrot.slane %v1141, 4
        %v1143 = vadd.f32 %v1141, %v1142
        %v1144 = vrot.slane %v1143, 2
        %v1145 = vadd.f32 %v1143, %v1144
        %v1146 = vrot.slane %v1145, 1
        %v1147 = vadd.f32 %v1145, %v1146
        %v1148 = vadd.f32 %v1086, %v1088
        %v1149 = vrot.slane %v1148, 4
        %v1150 = vadd.f32 %v1148, %v1149
        %v1151 = vrot.slane %v1150, 2
        %v1152 = vadd.f32 %v1150, %v1151
        %v1153 = vrot.slane %v1152, 1
        %v1154 = vadd.f32 %v1152, %v1153
        %v1155 = vadd.f32 %v1087, %v1089
        %v1156 = vrot.slane %v1155, 4
        %v1157 = vadd.f32 %v1155, %v1156
        %v1158 = vrot.slane %v1157, 2
        %v1159 = vadd.f32 %v1157, %v1158
        %v1160 = vrot.slane %v1159, 1
        %v1161 = vadd.f32 %v1159, %v1160
        %v1162 = vadd.f32 %v1090, %v1092
        %v1163 = vrot.slane %v1162, 4
        %v1164 = vadd.f32 %v1162, %v1163
        %v1165 = vrot.slane %v1164, 2
        %v1166 = vadd.f32 %v1164, %v1165
        %v1167 = vrot.slane %v1166, 1
        %v1168 = vadd.f32 %v1166, %v1167
        %v1169 = vadd.f32 %v1091, %v1093
        %v1170 = vrot.slane %v1169, 4
        %v1171 = vadd.f32 %v1169, %v1170
        %v1172 = vrot.slane %v1171, 2
        %v1173 = vadd.f32 %v1171, %v1172
        %v1174 = vrot.slane %v1173, 1
        %v1175 = vadd.f32 %v1173, %v1174
        %v1176 = vadd.f32 %v1094, %v1096
        %v1177 = vrot.slane %v1176, 4
        %v1178 = vadd.f32 %v1176, %v1177
        %v1179 = vrot.slane %v1178, 2
        %v1180 = vadd.f32 %v1178, %v1179
        %v1181 = vrot.slane %v1180, 1
        %v1182 = vadd.f32 %v1180, %v1181
        %v1183 = vadd.f32 %v1095, %v1097
        %v1184 = vrot.slane %v1183, 4
        %v1185 = vadd.f32 %v1183, %v1184
        %v1186 = vrot.slane %v1185, 2
        %v1187 = vadd.f32 %v1185, %v1186
        %v1188 = vrot.slane %v1187, 1
        %v1189 = vadd.f32 %v1187, %v1188
        %v1190 = vadd.f32 %v1098, %v1100
        %v1191 = vrot.slane %v1190, 4
        %v1192 = vadd.f32 %v1190, %v1191
        %v1193 = vrot.slane %v1192, 2
        %v1194 = vadd.f32 %v1192, %v1193
        %v1195 = vrot.slane %v1194, 1
        %v1196 = vadd.f32 %v1194, %v1195
        %v1197 = vadd.f32 %v1099, %v1101
        %v1198 = vrot.slane %v1197, 4
        %v1199 = vadd.f32 %v1197, %v1198
        %v1200 = vrot.slane %v1199, 2
        %v1201 = vadd.f32 %v1199, %v1200
        %v1202 = vrot.slane %v1201, 1
        %v1203 = vadd.f32 %v1201, %v1202
        %v1204 = vadd.f32 %v1102, %v1104
        %v1205 = vrot.slane %v1204, 4
        %v1206 = vadd.f32 %v1204, %v1205
        %v1207 = vrot.slane %v1206, 2
        %v1208 = vadd.f32 %v1206, %v1207
        %v1209 = vrot.slane %v1208, 1
        %v1210 = vadd.f32 %v1208, %v1209
        %v1211 = vadd.f32 %v1103, %v1105
        %v1212 = vrot.slane %v1211, 4
        %v1213 = vadd.f32 %v1211, %v1212
        %v1214 = vrot.slane %v1213, 2
        %v1215 = vadd.f32 %v1213, %v1214
        %v1216 = vrot.slane %v1215, 1
        %v1217 = vadd.f32 %v1215, %v1216
        %v1218 = vrcp.pop %v1025
        %v1219 = vmul.f32 1.0, %v1218
        %v1221 = vrot.slane %v1219, 1
        %v1222 = vrot.slane %v1219, 2
        %v1223 = vrot.slane %v1219, 3
        %v1224 = vrot.slane %v1219, 4
        %v1225 = vrot.slane %v1219, 5
        %v1226 = vrot.slane %v1219, 6
        %v1227 = vrot.slane %v1219, 7
        %v1236 = vmul.f32 %v1112, %v1219
        %v1237 = vmul.f32 %v1119, %v1219
        %v1238 = vmul.f32 %v1126, %v1221
        %v1239 = vmul.f32 %v1133, %v1221
        %v1240 = vmul.f32 %v1140, %v1222
        %v1241 = vmul.f32 %v1147, %v1222
        %v1242 = vmul.f32 %v1154, %v1223
        %v1243 = vmul.f32 %v1161, %v1223
        %v1244 = vmul.f32 %v1168, %v1224
        %v1245 = vmul.f32 %v1175, %v1224
        %v1246 = vmul.f32 %v1182, %v1225
        %v1247 = vmul.f32 %v1189, %v1225
        %v1248 = vmul.f32 %v1196, %v1226
        %v1249 = vmul.f32 %v1203, %v1226
        %v1250 = vmul.f32 %v1210, %v1227
        %v1251 = vmul.f32 %v1217, %v1227
        %v1268 = vrot.slane %v1238, 7
        %v1269 = vsel %vm771, %v1268, %v1236
        %v1270 = vrot.slane %v1240, 6
        %v1271 = vsel %vm773, %v1270, %v1269
        %v1272 = vrot.slane %v1242, 5
        %v1273 = vsel %vm775, %v1272, %v1271
        %v1274 = vrot.slane %v1244, 4
        %v1275 = vsel %vm777, %v1274, %v1273
        %v1276 = vrot.slane %v1246, 3
        %v1277 = vsel %vm779, %v1276, %v1275
        %v1278 = vrot.slane %v1248, 2
        %v1279 = vsel %vm781, %v1278, %v1277
        %v1280 = vrot.slane %v1250, 1
        %v1281 = vsel %vm783, %v1280, %v1279
        %v1282 = vrot.slane %v1239, 7
        %v1283 = vsel %vm771, %v1282, %v1237
        %v1284 = vrot.slane %v1241, 6
        %v1285 = vsel %vm773, %v1284, %v1283
        %v1286 = vrot.slane %v1243, 5
        %v1287 = vsel %vm775, %v1286, %v1285
        %v1288 = vrot.slane %v1245, 4
        %v1289 = vsel %vm777, %v1288, %v1287
        %v1290 = vrot.slane %v1247, 3
        %v1291 = vsel %vm779, %v1290, %v1289
        %v1292 = vrot.slane %v1249, 2
        %v1293 = vsel %vm781, %v1292, %v1291
        %v1294 = vrot.slane %v1251, 1
        %v1295 = vsel %vm783, %v1294, %v1293
        %1298 = vst [vmem:[%s259] sm:$0xff] %v1281
        %1299 = vst [vmem:[%s259 + $0x8] sm:$0xff] %v1295
        %s1300 = sand.u32 %s142, 1
        %s1301 = scalar_lea.sflag [#allocation5], %s1300
        %s1302 = sand.u32 %s142, 1
        %s1303 = smul.addr %s1302, 16
        %s1304 = scalar_lea.vmem [#allocation8], %s1303
        // Predicated region
        $region49: #{tpu_custom_call.1} parent=39 // pred_check
          %p1305 = pneg %p152
        $region50: #{tpu_custom_call.1} parent=39 // pred_check_branch
          %1307 = sbr.rel (%p1305) target = $region52
        $region51: #{tpu_custom_call.1} parent=39 // pred_region
          %s1309 = ssub.s32 256, 256
          %1310 = vsyncadd %s1301, %s1309
          %s1311 = smul.addr %s24, 2
          %s1312 = smul.addr %s1311, 128
          %s1313 = scalar_lea.hbm %s5, %s1312
          %s1315 = sshll.u32 %s1304, 4
          %s1316 = int_to_ptr.vmem [resolvable:$true] %s1315
          %1318 = dma.vmem_to_hbm [thread:$0]  %s1316, 256, %s1313, %s1301
        $region52: #{tpu_custom_call.1} parent=39 // pred_fallthru
          _
      $region40: #{tpu_custom_call.1} parent=5 // pred_fallthru
        _
      %p1319 = scmp.le.s32.totalorder 2, %s19
      // Predicated region
      $region53: #{tpu_custom_call.1} parent=5 // pred_check
        %p1320 = pneg %p1319
      $region54: #{tpu_custom_call.1} parent=5 // pred_check_branch
        %1322 = sbr.rel (%p1320) target = $region56
      $region55: #{tpu_custom_call.1} parent=5 // pred_region
        %s1323 = ssub.s32 %s19, 2
        // Predicated region
        $region57: #{tpu_custom_call.1} parent=55 // pred_check
          %p1324 = pneg %p158
        $region58: #{tpu_custom_call.1} parent=55 // pred_check_branch
          %1326 = sbr.rel (%p1324) target = $region60
        $region59: #{tpu_custom_call.1} parent=55 // pred_region
          %s1327 = sand.u32 %s143, 1
          %s1328 = scalar_lea.sflag [#allocation5], %s1327
          %s1329 = sand.u32 %s143, 1
          %s1330 = smul.addr %s1329, 16
          %s1331 = scalar_lea.vmem [#allocation8], %s1330
          %1332 = dma.done %s1328, 256
        $region60: #{tpu_custom_call.1} parent=55 // pred_fallthru
          _
      $region56: #{tpu_custom_call.1} parent=5 // pred_fallthru
        _
    $region6: #{tpu_custom_call.1} parent=1 // loop_footer
      %s23 = sadd.s32 1, %s19
    $region7: #{tpu_custom_call.1} parent=1 // loop_footer_branch
      %18 = sbr.rel target = $region3
    $region8: #{tpu_custom_call.1} parent=1 // loop_exit
      _
    %1333 = vsyncpa [#allocation4], 1
    %s1334 = scalar_lea.sflag [#allocation4], 1
    %1335 = vsyncpa %s1334, 1
    %1336 = vsyncpa [#allocation7], 1
    %1337 = vsyncpa [#allocation5], 1
    %s1338 = scalar_lea.sflag [#allocation5], 1
    %1339 = vsyncpa %s1338, 1

</llo_original>
